<compile_context>
chip_gen: v6e
topology: v6e:2x2x1
jax: 0.10.0
libtpu: 0.0.40
codegen_flags: <defaults>
</compile_context>

<pallas_src>
import functools
import math

import jax
import jax.numpy as jnp
from jax.experimental import pallas as pl
from jax.experimental.pallas import tpu as pltpu

FP_DIM = 1489        # fp_type == 'mixed' (MACCS 167 + ErG 441 + PubChem 881)
FP_DIM_PAD = 1536    # 12 * 128: lane-dense K for fc1
FP_2_DIM = 512       # self.fp_2_dim
HIDDEN_DIM = 32      # args.units_dense (small synthetic choice)
HIDDEN_PAD = 128     # lane-dense output width (sliced back to HIDDEN_DIM)


def _round_up(x, m):
    return ((x + m - 1) // m) * m


def fpn_kernel(x_ref, w1_ref, b1_ref, w2_ref, b2_ref, o_ref):
    # fc1: [bm, 1536](bf16) @ [1536, 512](bf16) -> f32 accumulation on the MXU
    h = jnp.dot(x_ref[...], w1_ref[...], preferred_element_type=jnp.float32)
    h = h + b1_ref[...]
    # dropout (eval mode) -> identity, then ReLU
    h = jnp.maximum(h, 0.0)
    # fc2 in bf16 (MXU-native) with f32 accumulation; lane-dense 128-wide out.
    out = jnp.dot(h.astype(jnp.bfloat16), w2_ref[...],
                  preferred_element_type=jnp.float32)
    o_ref[...] = (out + b2_ref[...]).astype(o_ref.dtype)


def prepare_fpn_params(w1, b1, w2, b2):
    """One-time weight layout prep (transpose / pad / cast).

    Call once and reuse across forward calls -- keeps ~3 MB of per-call weight
    shuffling out of the hot path.
    """
    assert w1.shape == (FP_2_DIM, FP_DIM)
    hidden = w2.shape[0]
    assert w2.shape == (hidden, FP_2_DIM)
    w1_t = jnp.pad(w1.T, ((0, FP_DIM_PAD - FP_DIM), (0, 0))).astype(jnp.bfloat16)
    b1_r = b1.reshape(1, FP_2_DIM).astype(jnp.float32)
    w2_t = jnp.pad(w2.T, ((0, 0), (0, HIDDEN_PAD - hidden))).astype(jnp.bfloat16)
    b2_r = jnp.pad(b2.reshape(1, hidden),
                   ((0, 0), (0, HIDDEN_PAD - hidden))).astype(jnp.float32)
    return w1_t, b1_r, w2_t, b2_r


def _pick_block_m(n, requested):
    """block_m heuristic:
      * tiny batches: tile = round_up(n, 8) -- don't pad N=16 up to 1024 rows;
      * batches that would fit in a single (big) tile: split into 2 grid steps
        so v7x's two TensorCores both get work;
      * large batches: the requested tile (default 1024) to amortize the
        ~0.35 us per-grid-step overhead.
    """
    n8 = max(8, _round_up(n, 8))
    if n8 <= requested:
        if n8 >= 512:
            return _round_up(pl.cdiv(n8, 2), 8)
        return n8
    return requested


@functools.partial(jax.jit, static_argnames=("block_m", "hidden"))
def _fpn_pallas(fp, w1_t, b1_r, w2_t, b2_r, *, block_m, hidden):
    n, fp_dim = fp.shape
    n_pad = _round_up(n, block_m)
    # Fingerprints are 0/1 (exactly representable in bf16); the cast is a no-op
    # if the caller already stores them in bf16, leaving only the pad to a
    # lane-dense K=1536 / row-multiple-of-block_m as a pre-pass.
    x_p = jnp.pad(fp.astype(jnp.bfloat16),
                  ((0, n_pad - n), (0, FP_DIM_PAD - fp_dim)))

    out_padded = pl.pallas_call(
        fpn_kernel,
        out_shape=jax.ShapeDtypeStruct((n_pad, HIDDEN_PAD), jnp.float32),
        grid_spec=pltpu.PrefetchScalarGridSpec(
            num_scalar_prefetch=0,
            grid=(n_pad // block_m,),
            in_specs=[
                pl.BlockSpec((block_m, FP_DIM_PAD), lambda i: (i, 0)),     # x tile (bf16)
                # Grid-invariant operands: constant index_map => fetched once,
                # not re-DMA'd per step. (pl.Buffered(1) would only shave
                # ~1.75 MiB of double-buffer VMEM we don't need at ~11 MiB.)
                pl.BlockSpec((FP_DIM_PAD, FP_2_DIM), lambda i: (0, 0)),    # W1^T (bf16)
                pl.BlockSpec((1, FP_2_DIM), lambda i: (0, 0)),             # b1
                pl.BlockSpec((FP_2_DIM, HIDDEN_PAD), lambda i: (0, 0)),    # W2^T (bf16)
                pl.BlockSpec((1, HIDDEN_PAD), lambda i: (0, 0)),           # b2
            ],
            out_specs=pl.BlockSpec((block_m, HIDDEN_PAD), lambda i: (i, 0)),
        ),
        compiler_params=pltpu.CompilerParams(
            dimension_semantics=("parallel",),
        ),
    )(x_p, w1_t, b1_r, w2_t, b2_r)

    return out_padded[:n, :hidden]


def fpn_forward(fp_list, prepared_params, *, hidden=HIDDEN_DIM, block_m=1024):
    """FPN forward.

    fp_list: [N, 1489] fingerprints (f32 or bf16, values 0/1).
    prepared_params: output of prepare_fpn_params (cached).
    Returns [N, hidden] f32.
    """
    n, fp_dim = fp_list.shape
    assert fp_dim == FP_DIM
    bm = _pick_block_m(n, block_m)
    w1_t, b1_r, w2_t, b2_r = prepared_params
    return _fpn_pallas(fp_list, w1_t, b1_r, w2_t, b2_r, block_m=bm, hidden=hidden)


def init_params(key):
    """Deterministic nn.Linear-style init: U(-1/sqrt(fan_in), 1/sqrt(fan_in))."""
    k1, k2, k3, k4 = jax.random.split(key, 4)
    bound1 = 1.0 / math.sqrt(FP_DIM)
    bound2 = 1.0 / math.sqrt(FP_2_DIM)
    # PyTorch layout: [out_features, in_features]
    w1 = jax.random.uniform(k1, (FP_2_DIM, FP_DIM), jnp.float32, -bound1, bound1)
    b1 = jax.random.uniform(k2, (FP_2_DIM,), jnp.float32, -bound1, bound1)
    w2 = jax.random.uniform(k3, (HIDDEN_DIM, FP_2_DIM), jnp.float32, -bound2, bound2)
    b2 = jax.random.uniform(k4, (HIDDEN_DIM,), jnp.float32, -bound2, bound2)
    return w1, b1, w2, b2


def reference_forward(fp_list, w1, b1, w2, b2):
    # Mirrors the kernel's dtype choices: bf16 rounding of x / W1 / h / W2,
    # f32 accumulation everywhere.
    hp = jax.lax.Precision.HIGHEST
    x = fp_list.astype(jnp.bfloat16).astype(jnp.float32)
    w1f = w1.astype(jnp.bfloat16).astype(jnp.float32)
    h = jnp.dot(x, w1f.T, precision=hp) + b1
    h = jnp.maximum(h, 0.0)
    hb = h.astype(jnp.bfloat16).astype(jnp.float32)
    w2f = w2.astype(jnp.bfloat16).astype(jnp.float32)
    return jnp.dot(hb, w2f.T, precision=hp) + b2


if __name__ == "__main__":
    key = jax.random.PRNGKey(0)
    k_fp_small, k_fp_big, k_params = jax.random.split(key, 3)

    w1, b1, w2, b2 = init_params(k_params)
    prepared = prepare_fpn_params(w1, b1, w2, b2)   # one-time, cached

    ok = True
    # Case 1: tiny batch (single small tile, exercises the small-batch guard).
    N1 = 16
    fp_small = (jax.random.uniform(k_fp_small, (N1, FP_DIM)) > 0.8).astype(jnp.bfloat16)
    out1 = jax.block_until_ready(fpn_forward(fp_small, prepared))
    ref1 = reference_forward(fp_small.astype(jnp.float32), w1, b1, w2, b2)
    ok &= out1.shape == (N1, HIDDEN_DIM)
    ok &= bool(jnp.allclose(out1, ref1, atol=1e-2, rtol=1e-2))

    # Case 2: multi-tile batch, non-multiple of block_m (exercises padding /
    # slicing and a >=2-step parallel grid for v7x's two TensorCores).
    N2 = 1000
    fp_big = (jax.random.uniform(k_fp_big, (N2, FP_DIM)) > 0.8).astype(jnp.bfloat16)
    out2 = jax.block_until_ready(fpn_forward(fp_big, prepared))
    ref2 = reference_forward(fp_big.astype(jnp.float32), w1, b1, w2, b2)
    ok &= out2.shape == (N2, HIDDEN_DIM)
    ok &= bool(jnp.allclose(out2, ref2, atol=1e-2, rtol=1e-2))

    assert ok, "mismatch vs reference"
    print("KERNEL_OK")
</pallas_src>

<mosaic_0001>
module attributes {stable_mosaic.version = 11 : i64} {
  func.func @fpn_kernel(%arg0: i32, %arg1: memref<16x1536xbf16, #tpu.memory_space<vmem>>, %arg2: memref<1536x512xbf16, #tpu.memory_space<vmem>>, %arg3: memref<1x512xf32, #tpu.memory_space<vmem>>, %arg4: memref<512x128xbf16, #tpu.memory_space<vmem>>, %arg5: memref<1x128xf32, #tpu.memory_space<vmem>>, %arg6: memref<16x128xf32, #tpu.memory_space<vmem>>) attributes {dimension_semantics = [#tpu.dimension_semantics<parallel>], iteration_bounds = array<i64: 1>, scalar_prefetch = 0 : i64, scratch_operands = 0 : i64, tpu.core_type = #tpu.core_type<tc>, window_params = [{transform_indices = @transform_0, window_bounds = array<i64: 16, 1536>}, {pipeline_mode = #tpu.pipeline_mode<synchronous>, transform_indices = @transform_1, window_bounds = array<i64: 1536, 512>}, {pipeline_mode = #tpu.pipeline_mode<synchronous>, transform_indices = @transform_2, window_bounds = array<i64: 1, 512>}, {pipeline_mode = #tpu.pipeline_mode<synchronous>, transform_indices = @transform_3, window_bounds = array<i64: 512, 128>}, {pipeline_mode = #tpu.pipeline_mode<synchronous>, transform_indices = @transform_4, window_bounds = array<i64: 1, 128>}, {transform_indices = @transform_5, window_bounds = array<i64: 16, 128>}]} {
    %c0 = arith.constant 0 : index
    %c0_0 = arith.constant 0 : index
    %0 = vector.load %arg1[%c0, %c0_0] : memref<16x1536xbf16, #tpu.memory_space<vmem>>, vector<16x1536xbf16>
    %c0_1 = arith.constant 0 : index
    %c0_2 = arith.constant 0 : index
    %1 = vector.load %arg2[%c0_1, %c0_2] : memref<1536x512xbf16, #tpu.memory_space<vmem>>, vector<1536x512xbf16>
    %cst = arith.constant dense<0.000000e+00> : vector<16x512xf32>
    %2 = tpu.matmul %0, %1, %cst {dimension_numbers = #tpu.dot_dimension_numbers<[1], [0], [0], [1], [0, 0, 1, 1], [], []>} : vector<16x1536xbf16>, vector<1536x512xbf16>, vector<16x512xf32> -> vector<16x512xf32>
    %c0_3 = arith.constant 0 : index
    %c0_4 = arith.constant 0 : index
    %3 = vector.load %arg3[%c0_3, %c0_4] : memref<1x512xf32, #tpu.memory_space<vmem>>, vector<1x512xf32>
    %4 = vector.broadcast %3 : vector<1x512xf32> to vector<16x512xf32>
    %5 = arith.addf %2, %4 : vector<16x512xf32>
    %cst_5 = arith.constant 0.000000e+00 : f32
    %6 = vector.broadcast %cst_5 : f32 to vector<16x512xf32>
    %7 = arith.maximumf %5, %6 : vector<16x512xf32>
    %8 = arith.truncf %7 : vector<16x512xf32> to vector<16x512xbf16>
    %c0_6 = arith.constant 0 : index
    %c0_7 = arith.constant 0 : index
    %9 = vector.load %arg4[%c0_6, %c0_7] : memref<512x128xbf16, #tpu.memory_space<vmem>>, vector<512x128xbf16>
    %cst_8 = arith.constant dense<0.000000e+00> : vector<16x128xf32>
    %10 = tpu.matmul %8, %9, %cst_8 {dimension_numbers = #tpu.dot_dimension_numbers<[1], [0], [0], [1], [0, 0, 1, 1], [], []>} : vector<16x512xbf16>, vector<512x128xbf16>, vector<16x128xf32> -> vector<16x128xf32>
    %c0_9 = arith.constant 0 : index
    %c0_10 = arith.constant 0 : index
    %11 = vector.load %arg5[%c0_9, %c0_10] : memref<1x128xf32, #tpu.memory_space<vmem>>, vector<1x128xf32>
    %12 = vector.broadcast %11 : vector<1x128xf32> to vector<16x128xf32>
    %13 = arith.addf %10, %12 : vector<16x128xf32>
    %c0_11 = arith.constant 0 : index
    %c0_12 = arith.constant 0 : index
    %14 = vector.load %arg6[%c0_11, %c0_12] : memref<16x128xf32, #tpu.memory_space<vmem>>, vector<16x128xf32>
    tpu.vector_store %arg6[%c0_11, %c0_12], %13 {strides = array<i32>} : memref<16x128xf32, #tpu.memory_space<vmem>>, vector<16x128xf32>,
    return
  }
  func.func @transform_0(%arg0: i32) -> (i32, i32) {
    %c0_i32 = arith.constant 0 : i32
    %c0_i32_0 = arith.constant 0 : i32
    return %arg0, %c0_i32 : i32, i32
  }
  func.func @transform_1(%arg0: i32) -> (i32, i32) {
    %c0_i32 = arith.constant 0 : i32
    %c0_i32_0 = arith.constant 0 : i32
    %c0_i32_1 = arith.constant 0 : i32
    return %c0_i32, %c0_i32_0 : i32, i32
  }
  func.func @transform_2(%arg0: i32) -> (i32, i32) {
    %c0_i32 = arith.constant 0 : i32
    %c0_i32_0 = arith.constant 0 : i32
    %c0_i32_1 = arith.constant 0 : i32
    return %c0_i32, %c0_i32_0 : i32, i32
  }
  func.func @transform_3(%arg0: i32) -> (i32, i32) {
    %c0_i32 = arith.constant 0 : i32
    %c0_i32_0 = arith.constant 0 : i32
    %c0_i32_1 = arith.constant 0 : i32
    return %c0_i32, %c0_i32_0 : i32, i32
  }
  func.func @transform_4(%arg0: i32) -> (i32, i32) {
    %c0_i32 = arith.constant 0 : i32
    %c0_i32_0 = arith.constant 0 : i32
    %c0_i32_1 = arith.constant 0 : i32
    return %c0_i32, %c0_i32_0 : i32, i32
  }
  func.func @transform_5(%arg0: i32) -> (i32, i32) {
    %c0_i32 = arith.constant 0 : i32
    %c0_i32_0 = arith.constant 0 : i32
    return %arg0, %c0_i32 : i32, i32
  }
}

</mosaic_0001>

<llo_original>
// kernel: _fpn_pallas.1
$region0: #{_fpn_pallas.1}
  #allocation0 [shape = 'u32[]', space=smem, size = 0x4, offset = 0x4, fixed_abs, tag = 'smem constant byte address 0x4 - core index']
  #allocation1 [shape = 'u32[144,128]{1,0:T(1,128)}', space=vmem, size = 0x12000, scoped, tag = 'internal scratch']
  %s0 = inlined_call_operand.vmem [shape: bf16[16,1536], index: 0, kind: input, shape index: {}]
  %s1 = inlined_call_operand.hbm [shape: bf16[1536,512], index: 1, kind: input, shape index: {}]
  %s2 = inlined_call_operand.hbm [shape: f32[1,512], index: 2, kind: input, shape index: {}]
  %s3 = inlined_call_operand.hbm [shape: bf16[512,128], index: 3, kind: input, shape index: {}]
  %s4 = inlined_call_operand.hbm [shape: f32[1,128], index: 4, kind: input, shape index: {}]
  %s5 = inlined_call_operand.hbm [shape: f32[16,128], index: 5, kind: output, shape index: {}]
  %s6 = sld [smem:[#allocation0]]
  $region46: #{_fpn_pallas.1} parent=0
    _
  %s8 = ssub.s32 1, %s6
  %s9 = scalar_select 0, %s8, %s6
  $region1: #{_fpn_pallas.1} parent=0
    #allocation2 [shape = 'u8[1572864]{0}', space=vmem, size = 0x180000, scoped, tag = 'input window, operand 1, single buffered']
    #allocation3 [shape = 's32[1]{0}', space=sflag, size = 0x4, scoped, tag = 'scoped memory for _fpn_pallas.1']
    #allocation4 [shape = 's32[1]{0}', space=sflag, size = 0x4, scoped, tag = 'scoped memory for _fpn_pallas.1']
    #allocation5 [shape = 'u8[2048]{0}', space=vmem, size = 0x800, scoped, tag = 'input window, operand 2, single buffered']
    #allocation6 [shape = 's32[1]{0}', space=sflag, size = 0x4, scoped, tag = 'scoped memory for _fpn_pallas.1']
    #allocation7 [shape = 'u8[131072]{0}', space=vmem, size = 0x20000, scoped, tag = 'input window, operand 3, single buffered']
    #allocation8 [shape = 'u8[512]{0}', space=vmem, size = 0x400, scoped, tag = 'input window, operand 4, single buffered']
    #allocation9 [shape = 's32[1]{0}', space=sflag, size = 0x4, scoped, tag = 'scoped memory for _fpn_pallas.1']
    #allocation10 [shape = 'u8[8192]{0}', space=vmem, size = 0x2000, scoped, tag = 'output window, operand 0, single buffered']
    %10 = vsyncpa [#allocation3], 0
    %11 = vsyncpa [#allocation6], 0
    %12 = vsyncpa [#allocation9], 0
    %13 = vsyncpa [#allocation4], 0
    // Predicated region
    $region2: #{_fpn_pallas.1} parent=1 // pred_check
      _
    $region3: #{_fpn_pallas.1} parent=1 // pred_check_branch
      %15 = sbr.rel (0) target = $region5
    $region4: #{_fpn_pallas.1} parent=1 // pred_region
      _
    $region5: #{_fpn_pallas.1} parent=1 // pred_fallthru
      _
    // Predicated region
    $region6: #{_fpn_pallas.1} parent=1 // pred_check
      _
    $region7: #{_fpn_pallas.1} parent=1 // pred_check_branch
      %17 = sbr.rel (0) target = $region9
    $region8: #{_fpn_pallas.1} parent=1 // pred_region
      %s19 = ssub.s32 49152, 49152
      %20 = vsyncadd [#allocation3], %s19
      %s21 = sshll.u32 [#allocation2], 4
      %s22 = int_to_ptr.vmem [resolvable:$true] %s21
      %27 = dma.hbm_to_vmem [thread:$0]  %s1, 49152, %s22, [#allocation3], 256, 256, 16
    $region9: #{_fpn_pallas.1} parent=1 // pred_fallthru
      _
    // Predicated region
    $region10: #{_fpn_pallas.1} parent=1 // pred_check
      _
    $region11: #{_fpn_pallas.1} parent=1 // pred_check_branch
      %29 = sbr.rel (0) target = $region13
    $region12: #{_fpn_pallas.1} parent=1 // pred_region
      %s31 = ssub.s32 64, 64
      %32 = vsyncadd [#allocation6], %s31
      %s34 = sshll.u32 [#allocation5], 4
      %s35 = int_to_ptr.vmem [resolvable:$true] %s34
      %37 = dma.hbm_to_vmem [thread:$0]  %s2, 64, %s35, [#allocation6]
    $region13: #{_fpn_pallas.1} parent=1 // pred_fallthru
      _
    // Predicated region
    $region14: #{_fpn_pallas.1} parent=1 // pred_check
      _
    $region15: #{_fpn_pallas.1} parent=1 // pred_check_branch
      %39 = sbr.rel (0) target = $region17
    $region16: #{_fpn_pallas.1} parent=1 // pred_region
      %s41 = ssub.s32 4096, 4096
      %42 = vsyncadd [#allocation6], %s41
      %s43 = sshll.u32 [#allocation7], 4
      %s44 = int_to_ptr.vmem [resolvable:$true] %s43
      %49 = dma.hbm_to_vmem [thread:$0]  %s3, 4096, %s44, [#allocation6], 64, 64, 4
    $region17: #{_fpn_pallas.1} parent=1 // pred_fallthru
      _
    // Predicated region
    $region18: #{_fpn_pallas.1} parent=1 // pred_check
      _
    $region19: #{_fpn_pallas.1} parent=1 // pred_check_branch
      %51 = sbr.rel (0) target = $region21
    $region20: #{_fpn_pallas.1} parent=1 // pred_region
      %s53 = ssub.s32 16, 16
      %54 = vsyncadd [#allocation9], %s53
      %s56 = sshll.u32 [#allocation8], 4
      %s57 = int_to_ptr.vmem [resolvable:$true] %s56
      %59 = dma.hbm_to_vmem [thread:$0]  %s4, 16, %s57, [#allocation9]
    $region21: #{_fpn_pallas.1} parent=1 // pred_fallthru
      _
    // Predicated region
    $region22: #{_fpn_pallas.1} parent=1 // pred_check
      _
    $region23: #{_fpn_pallas.1} parent=1 // pred_check_branch
      %61 = sbr.rel (0) target = $region25
    $region24: #{_fpn_pallas.1} parent=1 // pred_region
      %62 = dma.done [#allocation3], 49152
    $region25: #{_fpn_pallas.1} parent=1 // pred_fallthru
      _
    // Predicated region
    $region26: #{_fpn_pallas.1} parent=1 // pred_check
      _
    $region27: #{_fpn_pallas.1} parent=1 // pred_check_branch
      %64 = sbr.rel (0) target = $region29
    $region28: #{_fpn_pallas.1} parent=1 // pred_region
      %65 = dma.done [#allocation6], 64
    $region29: #{_fpn_pallas.1} parent=1 // pred_fallthru
      _
    // Predicated region
    $region30: #{_fpn_pallas.1} parent=1 // pred_check
      _
    $region31: #{_fpn_pallas.1} parent=1 // pred_check_branch
      %67 = sbr.rel (0) target = $region33
    $region32: #{_fpn_pallas.1} parent=1 // pred_region
      %68 = dma.done [#allocation6], 4096
    $region33: #{_fpn_pallas.1} parent=1 // pred_fallthru
      _
    // Predicated region
    $region34: #{_fpn_pallas.1} parent=1 // pred_check
      _
    $region35: #{_fpn_pallas.1} parent=1 // pred_check_branch
      %70 = sbr.rel (0) target = $region37
    $region36: #{_fpn_pallas.1} parent=1 // pred_region
      %71 = dma.done [#allocation9], 16
    $region37: #{_fpn_pallas.1} parent=1 // pred_fallthru
      _
    %v73 = vld [vmem:[%s0] sm:$0xff]
    %v74 = vld [vmem:[%s0 + $0x8] sm:$0xff]
    %v75 = vld [vmem:[%s0 + $0x10] sm:$0xff]
    %v76 = vld [vmem:[%s0 + $0x18] sm:$0xff]
    %v77 = vld [vmem:[%s0 + $0x20] sm:$0xff]
    %v78 = vld [vmem:[%s0 + $0x28] sm:$0xff]
    %v79 = vld [vmem:[%s0 + $0x30] sm:$0xff]
    %v80 = vld [vmem:[%s0 + $0x38] sm:$0xff]
    %v81 = vld [vmem:[%s0 + $0x40] sm:$0xff]
    %v82 = vld [vmem:[%s0 + $0x48] sm:$0xff]
    %v83 = vld [vmem:[%s0 + $0x50] sm:$0xff]
    %v84 = vld [vmem:[%s0 + $0x58] sm:$0xff]
    %v85 = vld [vmem:[#allocation2] sm:$0xff]
    %v86 = vld [vmem:[#allocation2 + $0x8] sm:$0xff]
    %v87 = vld [vmem:[#allocation2 + $0x10] sm:$0xff]
    %v88 = vld [vmem:[#allocation2 + $0x18] sm:$0xff]
    %v89 = vld [vmem:[#allocation2 + $0x20] sm:$0xff]
    %v90 = vld [vmem:[#allocation2 + $0x28] sm:$0xff]
    %v91 = vld [vmem:[#allocation2 + $0x30] sm:$0xff]
    %v92 = vld [vmem:[#allocation2 + $0x38] sm:$0xff]
    %v93 = vld [vmem:[#allocation2 + $0x40] sm:$0xff]
    %v94 = vld [vmem:[#allocation2 + $0x48] sm:$0xff]
    %v95 = vld [vmem:[#allocation2 + $0x50] sm:$0xff]
    %v96 = vld [vmem:[#allocation2 + $0x58] sm:$0xff]
    %v97 = vld [vmem:[#allocation2 + $0x60] sm:$0xff]
    %v98 = vld [vmem:[#allocation2 + $0x68] sm:$0xff]
    %v99 = vld [vmem:[#allocation2 + $0x70] sm:$0xff]
    %v100 = vld [vmem:[#allocation2 + $0x78] sm:$0xff]
    %v101 = vld [vmem:[#allocation2 + $0x80] sm:$0xff]
    %v102 = vld [vmem:[#allocation2 + $0x88] sm:$0xff]
    %v103 = vld [vmem:[#allocation2 + $0x90] sm:$0xff]
    %v104 = vld [vmem:[#allocation2 + $0x98] sm:$0xff]
    %v105 = vld [vmem:[#allocation2 + $0xa0] sm:$0xff]
    %v106 = vld [vmem:[#allocation2 + $0xa8] sm:$0xff]
    %v107 = vld [vmem:[#allocation2 + $0xb0] sm:$0xff]
    %v108 = vld [vmem:[#allocation2 + $0xb8] sm:$0xff]
    %v109 = vld [vmem:[#allocation2 + $0xc0] sm:$0xff]
    %v110 = vld [vmem:[#allocation2 + $0xc8] sm:$0xff]
    %v111 = vld [vmem:[#allocation2 + $0xd0] sm:$0xff]
    %v112 = vld [vmem:[#allocation2 + $0xd8] sm:$0xff]
    %v113 = vld [vmem:[#allocation2 + $0xe0] sm:$0xff]
    %v114 = vld [vmem:[#allocation2 + $0xe8] sm:$0xff]
    %v115 = vld [vmem:[#allocation2 + $0xf0] sm:$0xff]
    %v116 = vld [vmem:[#allocation2 + $0xf8] sm:$0xff]
    %v117 = vld [vmem:[#allocation2 + $0x100] sm:$0xff]
    %v118 = vld [vmem:[#allocation2 + $0x108] sm:$0xff]
    %v119 = vld [vmem:[#allocation2 + $0x110] sm:$0xff]
    %v120 = vld [vmem:[#allocation2 + $0x118] sm:$0xff]
    %v121 = vld [vmem:[#allocation2 + $0x120] sm:$0xff]
    %v122 = vld [vmem:[#allocation2 + $0x128] sm:$0xff]
    %v123 = vld [vmem:[#allocation2 + $0x130] sm:$0xff]
    %v124 = vld [vmem:[#allocation2 + $0x138] sm:$0xff]
    %v125 = vld [vmem:[#allocation2 + $0x140] sm:$0xff]
    %v126 = vld [vmem:[#allocation2 + $0x148] sm:$0xff]
    %v127 = vld [vmem:[#allocation2 + $0x150] sm:$0xff]
    %v128 = vld [vmem:[#allocation2 + $0x158] sm:$0xff]
    %v129 = vld [vmem:[#allocation2 + $0x160] sm:$0xff]
    %v130 = vld [vmem:[#allocation2 + $0x168] sm:$0xff]
    %v131 = vld [vmem:[#allocation2 + $0x170] sm:$0xff]
    %v132 = vld [vmem:[#allocation2 + $0x178] sm:$0xff]
    %v133 = vld [vmem:[#allocation2 + $0x180] sm:$0xff]
    %v134 = vld [vmem:[#allocation2 + $0x188] sm:$0xff]
    %v135 = vld [vmem:[#allocation2 + $0x190] sm:$0xff]
    %v136 = vld [vmem:[#allocation2 + $0x198] sm:$0xff]
    %v137 = vld [vmem:[#allocation2 + $0x1a0] sm:$0xff]
    %v138 = vld [vmem:[#allocation2 + $0x1a8] sm:$0xff]
    %v139 = vld [vmem:[#allocation2 + $0x1b0] sm:$0xff]
    %v140 = vld [vmem:[#allocation2 + $0x1b8] sm:$0xff]
    %v141 = vld [vmem:[#allocation2 + $0x1c0] sm:$0xff]
    %v142 = vld [vmem:[#allocation2 + $0x1c8] sm:$0xff]
    %v143 = vld [vmem:[#allocation2 + $0x1d0] sm:$0xff]
    %v144 = vld [vmem:[#allocation2 + $0x1d8] sm:$0xff]
    %v145 = vld [vmem:[#allocation2 + $0x1e0] sm:$0xff]
    %v146 = vld [vmem:[#allocation2 + $0x1e8] sm:$0xff]
    %v147 = vld [vmem:[#allocation2 + $0x1f0] sm:$0xff]
    %v148 = vld [vmem:[#allocation2 + $0x1f8] sm:$0xff]
    %v149 = vld [vmem:[#allocation2 + $0x200] sm:$0xff]
    %v150 = vld [vmem:[#allocation2 + $0x208] sm:$0xff]
    %v151 = vld [vmem:[#allocation2 + $0x210] sm:$0xff]
    %v152 = vld [vmem:[#allocation2 + $0x218] sm:$0xff]
    %v153 = vld [vmem:[#allocation2 + $0x220] sm:$0xff]
    %v154 = vld [vmem:[#allocation2 + $0x228] sm:$0xff]
    %v155 = vld [vmem:[#allocation2 + $0x230] sm:$0xff]
    %v156 = vld [vmem:[#allocation2 + $0x238] sm:$0xff]
    %v157 = vld [vmem:[#allocation2 + $0x240] sm:$0xff]
    %v158 = vld [vmem:[#allocation2 + $0x248] sm:$0xff]
    %v159 = vld [vmem:[#allocation2 + $0x250] sm:$0xff]
    %v160 = vld [vmem:[#allocation2 + $0x258] sm:$0xff]
    %v161 = vld [vmem:[#allocation2 + $0x260] sm:$0xff]
    %v162 = vld [vmem:[#allocation2 + $0x268] sm:$0xff]
    %v163 = vld [vmem:[#allocation2 + $0x270] sm:$0xff]
    %v164 = vld [vmem:[#allocation2 + $0x278] sm:$0xff]
    %v165 = vld [vmem:[#allocation2 + $0x280] sm:$0xff]
    %v166 = vld [vmem:[#allocation2 + $0x288] sm:$0xff]
    %v167 = vld [vmem:[#allocation2 + $0x290] sm:$0xff]
    %v168 = vld [vmem:[#allocation2 + $0x298] sm:$0xff]
    %v169 = vld [vmem:[#allocation2 + $0x2a0] sm:$0xff]
    %v170 = vld [vmem:[#allocation2 + $0x2a8] sm:$0xff]
    %v171 = vld [vmem:[#allocation2 + $0x2b0] sm:$0xff]
    %v172 = vld [vmem:[#allocation2 + $0x2b8] sm:$0xff]
    %v173 = vld [vmem:[#allocation2 + $0x2c0] sm:$0xff]
    %v174 = vld [vmem:[#allocation2 + $0x2c8] sm:$0xff]
    %v175 = vld [vmem:[#allocation2 + $0x2d0] sm:$0xff]
    %v176 = vld [vmem:[#allocation2 + $0x2d8] sm:$0xff]
    %v177 = vld [vmem:[#allocation2 + $0x2e0] sm:$0xff]
    %v178 = vld [vmem:[#allocation2 + $0x2e8] sm:$0xff]
    %v179 = vld [vmem:[#allocation2 + $0x2f0] sm:$0xff]
    %v180 = vld [vmem:[#allocation2 + $0x2f8] sm:$0xff]
    %v181 = vld [vmem:[#allocation2 + $0x300] sm:$0xff]
    %v182 = vld [vmem:[#allocation2 + $0x308] sm:$0xff]
    %v183 = vld [vmem:[#allocation2 + $0x310] sm:$0xff]
    %v184 = vld [vmem:[#allocation2 + $0x318] sm:$0xff]
    %v185 = vld [vmem:[#allocation2 + $0x320] sm:$0xff]
    %v186 = vld [vmem:[#allocation2 + $0x328] sm:$0xff]
    %v187 = vld [vmem:[#allocation2 + $0x330] sm:$0xff]
    %v188 = vld [vmem:[#allocation2 + $0x338] sm:$0xff]
    %v189 = vld [vmem:[#allocation2 + $0x340] sm:$0xff]
    %v190 = vld [vmem:[#allocation2 + $0x348] sm:$0xff]
    %v191 = vld [vmem:[#allocation2 + $0x350] sm:$0xff]
    %v192 = vld [vmem:[#allocation2 + $0x358] sm:$0xff]
    %v193 = vld [vmem:[#allocation2 + $0x360] sm:$0xff]
    %v194 = vld [vmem:[#allocation2 + $0x368] sm:$0xff]
    %v195 = vld [vmem:[#allocation2 + $0x370] sm:$0xff]
    %v196 = vld [vmem:[#allocation2 + $0x378] sm:$0xff]
    %v197 = vld [vmem:[#allocation2 + $0x380] sm:$0xff]
    %v198 = vld [vmem:[#allocation2 + $0x388] sm:$0xff]
    %v199 = vld [vmem:[#allocation2 + $0x390] sm:$0xff]
    %v200 = vld [vmem:[#allocation2 + $0x398] sm:$0xff]
    %v201 = vld [vmem:[#allocation2 + $0x3a0] sm:$0xff]
    %v202 = vld [vmem:[#allocation2 + $0x3a8] sm:$0xff]
    %v203 = vld [vmem:[#allocation2 + $0x3b0] sm:$0xff]
    %v204 = vld [vmem:[#allocation2 + $0x3b8] sm:$0xff]
    %v205 = vld [vmem:[#allocation2 + $0x3c0] sm:$0xff]
    %v206 = vld [vmem:[#allocation2 + $0x3c8] sm:$0xff]
    %v207 = vld [vmem:[#allocation2 + $0x3d0] sm:$0xff]
    %v208 = vld [vmem:[#allocation2 + $0x3d8] sm:$0xff]
    %v209 = vld [vmem:[#allocation2 + $0x3e0] sm:$0xff]
    %v210 = vld [vmem:[#allocation2 + $0x3e8] sm:$0xff]
    %v211 = vld [vmem:[#allocation2 + $0x3f0] sm:$0xff]
    %v212 = vld [vmem:[#allocation2 + $0x3f8] sm:$0xff]
    %v213 = vld [vmem:[#allocation2 + $0x400] sm:$0xff]
    %v214 = vld [vmem:[#allocation2 + $0x408] sm:$0xff]
    %v215 = vld [vmem:[#allocation2 + $0x410] sm:$0xff]
    %v216 = vld [vmem:[#allocation2 + $0x418] sm:$0xff]
    %v217 = vld [vmem:[#allocation2 + $0x420] sm:$0xff]
    %v218 = vld [vmem:[#allocation2 + $0x428] sm:$0xff]
    %v219 = vld [vmem:[#allocation2 + $0x430] sm:$0xff]
    %v220 = vld [vmem:[#allocation2 + $0x438] sm:$0xff]
    %v221 = vld [vmem:[#allocation2 + $0x440] sm:$0xff]
    %v222 = vld [vmem:[#allocation2 + $0x448] sm:$0xff]
    %v223 = vld [vmem:[#allocation2 + $0x450] sm:$0xff]
    %v224 = vld [vmem:[#allocation2 + $0x458] sm:$0xff]
    %v225 = vld [vmem:[#allocation2 + $0x460] sm:$0xff]
    %v226 = vld [vmem:[#allocation2 + $0x468] sm:$0xff]
    %v227 = vld [vmem:[#allocation2 + $0x470] sm:$0xff]
    %v228 = vld [vmem:[#allocation2 + $0x478] sm:$0xff]
    %v229 = vld [vmem:[#allocation2 + $0x480] sm:$0xff]
    %v230 = vld [vmem:[#allocation2 + $0x488] sm:$0xff]
    %v231 = vld [vmem:[#allocation2 + $0x490] sm:$0xff]
    %v232 = vld [vmem:[#allocation2 + $0x498] sm:$0xff]
    %v233 = vld [vmem:[#allocation2 + $0x4a0] sm:$0xff]
    %v234 = vld [vmem:[#allocation2 + $0x4a8] sm:$0xff]
    %v235 = vld [vmem:[#allocation2 + $0x4b0] sm:$0xff]
    %v236 = vld [vmem:[#allocation2 + $0x4b8] sm:$0xff]
    %v237 = vld [vmem:[#allocation2 + $0x4c0] sm:$0xff]
    %v238 = vld [vmem:[#allocation2 + $0x4c8] sm:$0xff]
    %v239 = vld [vmem:[#allocation2 + $0x4d0] sm:$0xff]
    %v240 = vld [vmem:[#allocation2 + $0x4d8] sm:$0xff]
    %v241 = vld [vmem:[#allocation2 + $0x4e0] sm:$0xff]
    %v242 = vld [vmem:[#allocation2 + $0x4e8] sm:$0xff]
    %v243 = vld [vmem:[#allocation2 + $0x4f0] sm:$0xff]
    %v244 = vld [vmem:[#allocation2 + $0x4f8] sm:$0xff]
    %v245 = vld [vmem:[#allocation2 + $0x500] sm:$0xff]
    %v246 = vld [vmem:[#allocation2 + $0x508] sm:$0xff]
    %v247 = vld [vmem:[#allocation2 + $0x510] sm:$0xff]
    %v248 = vld [vmem:[#allocation2 + $0x518] sm:$0xff]
    %v249 = vld [vmem:[#allocation2 + $0x520] sm:$0xff]
    %v250 = vld [vmem:[#allocation2 + $0x528] sm:$0xff]
    %v251 = vld [vmem:[#allocation2 + $0x530] sm:$0xff]
    %v252 = vld [vmem:[#allocation2 + $0x538] sm:$0xff]
    %v253 = vld [vmem:[#allocation2 + $0x540] sm:$0xff]
    %v254 = vld [vmem:[#allocation2 + $0x548] sm:$0xff]
    %v255 = vld [vmem:[#allocation2 + $0x550] sm:$0xff]
    %v256 = vld [vmem:[#allocation2 + $0x558] sm:$0xff]
    %v257 = vld [vmem:[#allocation2 + $0x560] sm:$0xff]
    %v258 = vld [vmem:[#allocation2 + $0x568] sm:$0xff]
    %v259 = vld [vmem:[#allocation2 + $0x570] sm:$0xff]
    %v260 = vld [vmem:[#allocation2 + $0x578] sm:$0xff]
    %v261 = vld [vmem:[#allocation2 + $0x580] sm:$0xff]
    %v262 = vld [vmem:[#allocation2 + $0x588] sm:$0xff]
    %v263 = vld [vmem:[#allocation2 + $0x590] sm:$0xff]
    %v264 = vld [vmem:[#allocation2 + $0x598] sm:$0xff]
    %v265 = vld [vmem:[#allocation2 + $0x5a0] sm:$0xff]
    %v266 = vld [vmem:[#allocation2 + $0x5a8] sm:$0xff]
    %v267 = vld [vmem:[#allocation2 + $0x5b0] sm:$0xff]
    %v268 = vld [vmem:[#allocation2 + $0x5b8] sm:$0xff]
    %v269 = vld [vmem:[#allocation2 + $0x5c0] sm:$0xff]
    %v270 = vld [vmem:[#allocation2 + $0x5c8] sm:$0xff]
    %v271 = vld [vmem:[#allocation2 + $0x5d0] sm:$0xff]
    %v272 = vld [vmem:[#allocation2 + $0x5d8] sm:$0xff]
    %v273 = vld [vmem:[#allocation2 + $0x5e0] sm:$0xff]
    %v274 = vld [vmem:[#allocation2 + $0x5e8] sm:$0xff]
    %v275 = vld [vmem:[#allocation2 + $0x5f0] sm:$0xff]
    %v276 = vld [vmem:[#allocation2 + $0x5f8] sm:$0xff]
    %v277 = vld [vmem:[#allocation2 + $0x600] sm:$0xff]
    %v278 = vld [vmem:[#allocation2 + $0x608] sm:$0xff]
    %v279 = vld [vmem:[#allocation2 + $0x610] sm:$0xff]
    %v280 = vld [vmem:[#allocation2 + $0x618] sm:$0xff]
    %v281 = vld [vmem:[#allocation2 + $0x620] sm:$0xff]
    %v282 = vld [vmem:[#allocation2 + $0x628] sm:$0xff]
    %v283 = vld [vmem:[#allocation2 + $0x630] sm:$0xff]
    %v284 = vld [vmem:[#allocation2 + $0x638] sm:$0xff]
    %v285 = vld [vmem:[#allocation2 + $0x640] sm:$0xff]
    %v286 = vld [vmem:[#allocation2 + $0x648] sm:$0xff]
    %v287 = vld [vmem:[#allocation2 + $0x650] sm:$0xff]
    %v288 = vld [vmem:[#allocation2 + $0x658] sm:$0xff]
    %v289 = vld [vmem:[#allocation2 + $0x660] sm:$0xff]
    %v290 = vld [vmem:[#allocation2 + $0x668] sm:$0xff]
    %v291 = vld [vmem:[#allocation2 + $0x670] sm:$0xff]
    %v292 = vld [vmem:[#allocation2 + $0x678] sm:$0xff]
    %v293 = vld [vmem:[#allocation2 + $0x680] sm:$0xff]
    %v294 = vld [vmem:[#allocation2 + $0x688] sm:$0xff]
    %v295 = vld [vmem:[#allocation2 + $0x690] sm:$0xff]
    %v296 = vld [vmem:[#allocation2 + $0x698] sm:$0xff]
    %v297 = vld [vmem:[#allocation2 + $0x6a0] sm:$0xff]
    %v298 = vld [vmem:[#allocation2 + $0x6a8] sm:$0xff]
    %v299 = vld [vmem:[#allocation2 + $0x6b0] sm:$0xff]
    %v300 = vld [vmem:[#allocation2 + $0x6b8] sm:$0xff]
    %v301 = vld [vmem:[#allocation2 + $0x6c0] sm:$0xff]
    %v302 = vld [vmem:[#allocation2 + $0x6c8] sm:$0xff]
    %v303 = vld [vmem:[#allocation2 + $0x6d0] sm:$0xff]
    %v304 = vld [vmem:[#allocation2 + $0x6d8] sm:$0xff]
    %v305 = vld [vmem:[#allocation2 + $0x6e0] sm:$0xff]
    %v306 = vld [vmem:[#allocation2 + $0x6e8] sm:$0xff]
    %v307 = vld [vmem:[#allocation2 + $0x6f0] sm:$0xff]
    %v308 = vld [vmem:[#allocation2 + $0x6f8] sm:$0xff]
    %v309 = vld [vmem:[#allocation2 + $0x700] sm:$0xff]
    %v310 = vld [vmem:[#allocation2 + $0x708] sm:$0xff]
    %v311 = vld [vmem:[#allocation2 + $0x710] sm:$0xff]
    %v312 = vld [vmem:[#allocation2 + $0x718] sm:$0xff]
    %v313 = vld [vmem:[#allocation2 + $0x720] sm:$0xff]
    %v314 = vld [vmem:[#allocation2 + $0x728] sm:$0xff]
    %v315 = vld [vmem:[#allocation2 + $0x730] sm:$0xff]
    %v316 = vld [vmem:[#allocation2 + $0x738] sm:$0xff]
    %v317 = vld [vmem:[#allocation2 + $0x740] sm:$0xff]
    %v318 = vld [vmem:[#allocation2 + $0x748] sm:$0xff]
    %v319 = vld [vmem:[#allocation2 + $0x750] sm:$0xff]
    %v320 = vld [vmem:[#allocation2 + $0x758] sm:$0xff]
    %v321 = vld [vmem:[#allocation2 + $0x760] sm:$0xff]
    %v322 = vld [vmem:[#allocation2 + $0x768] sm:$0xff]
    %v323 = vld [vmem:[#allocation2 + $0x770] sm:$0xff]
    %v324 = vld [vmem:[#allocation2 + $0x778] sm:$0xff]
    %v325 = vld [vmem:[#allocation2 + $0x780] sm:$0xff]
    %v326 = vld [vmem:[#allocation2 + $0x788] sm:$0xff]
    %v327 = vld [vmem:[#allocation2 + $0x790] sm:$0xff]
    %v328 = vld [vmem:[#allocation2 + $0x798] sm:$0xff]
    %v329 = vld [vmem:[#allocation2 + $0x7a0] sm:$0xff]
    %v330 = vld [vmem:[#allocation2 + $0x7a8] sm:$0xff]
    %v331 = vld [vmem:[#allocation2 + $0x7b0] sm:$0xff]
    %v332 = vld [vmem:[#allocation2 + $0x7b8] sm:$0xff]
    %v333 = vld [vmem:[#allocation2 + $0x7c0] sm:$0xff]
    %v334 = vld [vmem:[#allocation2 + $0x7c8] sm:$0xff]
    %v335 = vld [vmem:[#allocation2 + $0x7d0] sm:$0xff]
    %v336 = vld [vmem:[#allocation2 + $0x7d8] sm:$0xff]
    %v337 = vld [vmem:[#allocation2 + $0x7e0] sm:$0xff]
    %v338 = vld [vmem:[#allocation2 + $0x7e8] sm:$0xff]
    %v339 = vld [vmem:[#allocation2 + $0x7f0] sm:$0xff]
    %v340 = vld [vmem:[#allocation2 + $0x7f8] sm:$0xff]
    %v341 = vld [vmem:[#allocation2 + $0x800] sm:$0xff]
    %v342 = vld [vmem:[#allocation2 + $0x808] sm:$0xff]
    %v343 = vld [vmem:[#allocation2 + $0x810] sm:$0xff]
    %v344 = vld [vmem:[#allocation2 + $0x818] sm:$0xff]
    %v345 = vld [vmem:[#allocation2 + $0x820] sm:$0xff]
    %v346 = vld [vmem:[#allocation2 + $0x828] sm:$0xff]
    %v347 = vld [vmem:[#allocation2 + $0x830] sm:$0xff]
    %v348 = vld [vmem:[#allocation2 + $0x838] sm:$0xff]
    %v349 = vld [vmem:[#allocation2 + $0x840] sm:$0xff]
    %v350 = vld [vmem:[#allocation2 + $0x848] sm:$0xff]
    %v351 = vld [vmem:[#allocation2 + $0x850] sm:$0xff]
    %v352 = vld [vmem:[#allocation2 + $0x858] sm:$0xff]
    %v353 = vld [vmem:[#allocation2 + $0x860] sm:$0xff]
    %v354 = vld [vmem:[#allocation2 + $0x868] sm:$0xff]
    %v355 = vld [vmem:[#allocation2 + $0x870] sm:$0xff]
    %v356 = vld [vmem:[#allocation2 + $0x878] sm:$0xff]
    %v357 = vld [vmem:[#allocation2 + $0x880] sm:$0xff]
    %v358 = vld [vmem:[#allocation2 + $0x888] sm:$0xff]
    %v359 = vld [vmem:[#allocation2 + $0x890] sm:$0xff]
    %v360 = vld [vmem:[#allocation2 + $0x898] sm:$0xff]
    %v361 = vld [vmem:[#allocation2 + $0x8a0] sm:$0xff]
    %v362 = vld [vmem:[#allocation2 + $0x8a8] sm:$0xff]
    %v363 = vld [vmem:[#allocation2 + $0x8b0] sm:$0xff]
    %v364 = vld [vmem:[#allocation2 + $0x8b8] sm:$0xff]
    %v365 = vld [vmem:[#allocation2 + $0x8c0] sm:$0xff]
    %v366 = vld [vmem:[#allocation2 + $0x8c8] sm:$0xff]
    %v367 = vld [vmem:[#allocation2 + $0x8d0] sm:$0xff]
    %v368 = vld [vmem:[#allocation2 + $0x8d8] sm:$0xff]
    %v369 = vld [vmem:[#allocation2 + $0x8e0] sm:$0xff]
    %v370 = vld [vmem:[#allocation2 + $0x8e8] sm:$0xff]
    %v371 = vld [vmem:[#allocation2 + $0x8f0] sm:$0xff]
    %v372 = vld [vmem:[#allocation2 + $0x8f8] sm:$0xff]
    %v373 = vld [vmem:[#allocation2 + $0x900] sm:$0xff]
    %v374 = vld [vmem:[#allocation2 + $0x908] sm:$0xff]
    %v375 = vld [vmem:[#allocation2 + $0x910] sm:$0xff]
    %v376 = vld [vmem:[#allocation2 + $0x918] sm:$0xff]
    %v377 = vld [vmem:[#allocation2 + $0x920] sm:$0xff]
    %v378 = vld [vmem:[#allocation2 + $0x928] sm:$0xff]
    %v379 = vld [vmem:[#allocation2 + $0x930] sm:$0xff]
    %v380 = vld [vmem:[#allocation2 + $0x938] sm:$0xff]
    %v381 = vld [vmem:[#allocation2 + $0x940] sm:$0xff]
    %v382 = vld [vmem:[#allocation2 + $0x948] sm:$0xff]
    %v383 = vld [vmem:[#allocation2 + $0x950] sm:$0xff]
    %v384 = vld [vmem:[#allocation2 + $0x958] sm:$0xff]
    %v385 = vld [vmem:[#allocation2 + $0x960] sm:$0xff]
    %v386 = vld [vmem:[#allocation2 + $0x968] sm:$0xff]
    %v387 = vld [vmem:[#allocation2 + $0x970] sm:$0xff]
    %v388 = vld [vmem:[#allocation2 + $0x978] sm:$0xff]
    %v389 = vld [vmem:[#allocation2 + $0x980] sm:$0xff]
    %v390 = vld [vmem:[#allocation2 + $0x988] sm:$0xff]
    %v391 = vld [vmem:[#allocation2 + $0x990] sm:$0xff]
    %v392 = vld [vmem:[#allocation2 + $0x998] sm:$0xff]
    %v393 = vld [vmem:[#allocation2 + $0x9a0] sm:$0xff]
    %v394 = vld [vmem:[#allocation2 + $0x9a8] sm:$0xff]
    %v395 = vld [vmem:[#allocation2 + $0x9b0] sm:$0xff]
    %v396 = vld [vmem:[#allocation2 + $0x9b8] sm:$0xff]
    %v397 = vld [vmem:[#allocation2 + $0x9c0] sm:$0xff]
    %v398 = vld [vmem:[#allocation2 + $0x9c8] sm:$0xff]
    %v399 = vld [vmem:[#allocation2 + $0x9d0] sm:$0xff]
    %v400 = vld [vmem:[#allocation2 + $0x9d8] sm:$0xff]
    %v401 = vld [vmem:[#allocation2 + $0x9e0] sm:$0xff]
    %v402 = vld [vmem:[#allocation2 + $0x9e8] sm:$0xff]
    %v403 = vld [vmem:[#allocation2 + $0x9f0] sm:$0xff]
    %v404 = vld [vmem:[#allocation2 + $0x9f8] sm:$0xff]
    %v405 = vld [vmem:[#allocation2 + $0xa00] sm:$0xff]
    %v406 = vld [vmem:[#allocation2 + $0xa08] sm:$0xff]
    %v407 = vld [vmem:[#allocation2 + $0xa10] sm:$0xff]
    %v408 = vld [vmem:[#allocation2 + $0xa18] sm:$0xff]
    %v409 = vld [vmem:[#allocation2 + $0xa20] sm:$0xff]
    %v410 = vld [vmem:[#allocation2 + $0xa28] sm:$0xff]
    %v411 = vld [vmem:[#allocation2 + $0xa30] sm:$0xff]
    %v412 = vld [vmem:[#allocation2 + $0xa38] sm:$0xff]
    %v413 = vld [vmem:[#allocation2 + $0xa40] sm:$0xff]
    %v414 = vld [vmem:[#allocation2 + $0xa48] sm:$0xff]
    %v415 = vld [vmem:[#allocation2 + $0xa50] sm:$0xff]
    %v416 = vld [vmem:[#allocation2 + $0xa58] sm:$0xff]
    %v417 = vld [vmem:[#allocation2 + $0xa60] sm:$0xff]
    %v418 = vld [vmem:[#allocation2 + $0xa68] sm:$0xff]
    %v419 = vld [vmem:[#allocation2 + $0xa70] sm:$0xff]
    %v420 = vld [vmem:[#allocation2 + $0xa78] sm:$0xff]
    %v421 = vld [vmem:[#allocation2 + $0xa80] sm:$0xff]
    %v422 = vld [vmem:[#allocation2 + $0xa88] sm:$0xff]
    %v423 = vld [vmem:[#allocation2 + $0xa90] sm:$0xff]
    %v424 = vld [vmem:[#allocation2 + $0xa98] sm:$0xff]
    %v425 = vld [vmem:[#allocation2 + $0xaa0] sm:$0xff]
    %v426 = vld [vmem:[#allocation2 + $0xaa8] sm:$0xff]
    %v427 = vld [vmem:[#allocation2 + $0xab0] sm:$0xff]
    %v428 = vld [vmem:[#allocation2 + $0xab8] sm:$0xff]
    %v429 = vld [vmem:[#allocation2 + $0xac0] sm:$0xff]
    %v430 = vld [vmem:[#allocation2 + $0xac8] sm:$0xff]
    %v431 = vld [vmem:[#allocation2 + $0xad0] sm:$0xff]
    %v432 = vld [vmem:[#allocation2 + $0xad8] sm:$0xff]
    %v433 = vld [vmem:[#allocation2 + $0xae0] sm:$0xff]
    %v434 = vld [vmem:[#allocation2 + $0xae8] sm:$0xff]
    %v435 = vld [vmem:[#allocation2 + $0xaf0] sm:$0xff]
    %v436 = vld [vmem:[#allocation2 + $0xaf8] sm:$0xff]
    %v437 = vld [vmem:[#allocation2 + $0xb00] sm:$0xff]
    %v438 = vld [vmem:[#allocation2 + $0xb08] sm:$0xff]
    %v439 = vld [vmem:[#allocation2 + $0xb10] sm:$0xff]
    %v440 = vld [vmem:[#allocation2 + $0xb18] sm:$0xff]
    %v441 = vld [vmem:[#allocation2 + $0xb20] sm:$0xff]
    %v442 = vld [vmem:[#allocation2 + $0xb28] sm:$0xff]
    %v443 = vld [vmem:[#allocation2 + $0xb30] sm:$0xff]
    %v444 = vld [vmem:[#allocation2 + $0xb38] sm:$0xff]
    %v445 = vld [vmem:[#allocation2 + $0xb40] sm:$0xff]
    %v446 = vld [vmem:[#allocation2 + $0xb48] sm:$0xff]
    %v447 = vld [vmem:[#allocation2 + $0xb50] sm:$0xff]
    %v448 = vld [vmem:[#allocation2 + $0xb58] sm:$0xff]
    %v449 = vld [vmem:[#allocation2 + $0xb60] sm:$0xff]
    %v450 = vld [vmem:[#allocation2 + $0xb68] sm:$0xff]
    %v451 = vld [vmem:[#allocation2 + $0xb70] sm:$0xff]
    %v452 = vld [vmem:[#allocation2 + $0xb78] sm:$0xff]
    %v453 = vld [vmem:[#allocation2 + $0xb80] sm:$0xff]
    %v454 = vld [vmem:[#allocation2 + $0xb88] sm:$0xff]
    %v455 = vld [vmem:[#allocation2 + $0xb90] sm:$0xff]
    %v456 = vld [vmem:[#allocation2 + $0xb98] sm:$0xff]
    %v457 = vld [vmem:[#allocation2 + $0xba0] sm:$0xff]
    %v458 = vld [vmem:[#allocation2 + $0xba8] sm:$0xff]
    %v459 = vld [vmem:[#allocation2 + $0xbb0] sm:$0xff]
    %v460 = vld [vmem:[#allocation2 + $0xbb8] sm:$0xff]
    %v461 = vld [vmem:[#allocation2 + $0xbc0] sm:$0xff]
    %v462 = vld [vmem:[#allocation2 + $0xbc8] sm:$0xff]
    %v463 = vld [vmem:[#allocation2 + $0xbd0] sm:$0xff]
    %v464 = vld [vmem:[#allocation2 + $0xbd8] sm:$0xff]
    %v465 = vld [vmem:[#allocation2 + $0xbe0] sm:$0xff]
    %v466 = vld [vmem:[#allocation2 + $0xbe8] sm:$0xff]
    %v467 = vld [vmem:[#allocation2 + $0xbf0] sm:$0xff]
    %v468 = vld [vmem:[#allocation2 + $0xbf8] sm:$0xff]
    %v469 = vld [vmem:[#allocation5] sm:$0xf]
    %v471 = vlaneseq
    %v472 = vshrl.u32 %v471, 7
    %v473 = vsub.s32 0, %v472
    %v474 = vrot.slane %v469, %v473
    %v475 = vlaneseq
    %v476 = vshrl.u32 %v475, 7
    %v477 = vsub.s32 1, %v476
    %v478 = vrot.slane %v469, %v477
    %v479 = vlaneseq
    %v480 = vshrl.u32 %v479, 7
    %v481 = vsub.s32 2, %v480
    %v482 = vrot.slane %v469, %v481
    %v483 = vlaneseq
    %v484 = vshrl.u32 %v483, 7
    %v485 = vsub.s32 3, %v484
    %v486 = vrot.slane %v469, %v485
    %v503 = vunpack.c.l.b16 %v73
    %v504 = vunpack.c.h.b16 %v73
    %v505 = vunpack.c.l.b16 %v74
    %v506 = vunpack.c.h.b16 %v74
    %v507 = vunpack.c.l.b16 %v75
    %v508 = vunpack.c.h.b16 %v75
    %v509 = vunpack.c.l.b16 %v76
    %v510 = vunpack.c.h.b16 %v76
    %v511 = vunpack.c.l.b16 %v77
    %v512 = vunpack.c.h.b16 %v77
    %v513 = vunpack.c.l.b16 %v78
    %v514 = vunpack.c.h.b16 %v78
    %v515 = vunpack.c.l.b16 %v79
    %v516 = vunpack.c.h.b16 %v79
    %v517 = vunpack.c.l.b16 %v80
    %v518 = vunpack.c.h.b16 %v80
    %v519 = vunpack.c.l.b16 %v81
    %v520 = vunpack.c.h.b16 %v81
    %v521 = vunpack.c.l.b16 %v82
    %v522 = vunpack.c.h.b16 %v82
    %v523 = vunpack.c.l.b16 %v83
    %v524 = vunpack.c.h.b16 %v83
    %v525 = vunpack.c.l.b16 %v84
    %v526 = vunpack.c.h.b16 %v84
    %v527 = vpack.c.b16 %v515, %v503
    %v528 = vpack.c.b16 %v516, %v504
    %v529 = vpack.c.b16 %v517, %v505
    %v530 = vpack.c.b16 %v518, %v506
    %v531 = vpack.c.b16 %v519, %v507
    %v532 = vpack.c.b16 %v520, %v508
    %v533 = vpack.c.b16 %v521, %v509
    %v534 = vpack.c.b16 %v522, %v510
    %v535 = vpack.c.b16 %v523, %v511
    %v536 = vpack.c.b16 %v524, %v512
    %v537 = vpack.c.b16 %v525, %v513
    %v538 = vpack.c.b16 %v526, %v514
    %v935 = vunpack.c.l.b16 %v85
    %v936 = vunpack.c.h.b16 %v85
    %v937 = vunpack.c.l.b16 %v86
    %v938 = vunpack.c.h.b16 %v86
    %v939 = vunpack.c.l.b16 %v87
    %v940 = vunpack.c.h.b16 %v87
    %v941 = vunpack.c.l.b16 %v88
    %v942 = vunpack.c.h.b16 %v88
    %v943 = vunpack.c.l.b16 %v89
    %v944 = vunpack.c.h.b16 %v89
    %v945 = vunpack.c.l.b16 %v90
    %v946 = vunpack.c.h.b16 %v90
    %v947 = vunpack.c.l.b16 %v91
    %v948 = vunpack.c.h.b16 %v91
    %v949 = vunpack.c.l.b16 %v92
    %v950 = vunpack.c.h.b16 %v92
    %v951 = vunpack.c.l.b16 %v93
    %v952 = vunpack.c.h.b16 %v93
    %v953 = vunpack.c.l.b16 %v94
    %v954 = vunpack.c.h.b16 %v94
    %v955 = vunpack.c.l.b16 %v95
    %v956 = vunpack.c.h.b16 %v95
    %v957 = vunpack.c.l.b16 %v96
    %v958 = vunpack.c.h.b16 %v96
    %v959 = vunpack.c.l.b16 %v97
    %v960 = vunpack.c.h.b16 %v97
    %v961 = vunpack.c.l.b16 %v98
    %v962 = vunpack.c.h.b16 %v98
    %v963 = vunpack.c.l.b16 %v99
    %v964 = vunpack.c.h.b16 %v99
    %v965 = vunpack.c.l.b16 %v100
    %v966 = vunpack.c.h.b16 %v100
    %v967 = vunpack.c.l.b16 %v101
    %v968 = vunpack.c.h.b16 %v101
    %v969 = vunpack.c.l.b16 %v102
    %v970 = vunpack.c.h.b16 %v102
    %v971 = vunpack.c.l.b16 %v103
    %v972 = vunpack.c.h.b16 %v103
    %v973 = vunpack.c.l.b16 %v104
    %v974 = vunpack.c.h.b16 %v104
    %v975 = vunpack.c.l.b16 %v105
    %v976 = vunpack.c.h.b16 %v105
    %v977 = vunpack.c.l.b16 %v106
    %v978 = vunpack.c.h.b16 %v106
    %v979 = vunpack.c.l.b16 %v107
    %v980 = vunpack.c.h.b16 %v107
    %v981 = vunpack.c.l.b16 %v108
    %v982 = vunpack.c.h.b16 %v108
    %v983 = vunpack.c.l.b16 %v109
    %v984 = vunpack.c.h.b16 %v109
    %v985 = vunpack.c.l.b16 %v110
    %v986 = vunpack.c.h.b16 %v110
    %v987 = vunpack.c.l.b16 %v111
    %v988 = vunpack.c.h.b16 %v111
    %v989 = vunpack.c.l.b16 %v112
    %v990 = vunpack.c.h.b16 %v112
    %v991 = vunpack.c.l.b16 %v113
    %v992 = vunpack.c.h.b16 %v113
    %v993 = vunpack.c.l.b16 %v114
    %v994 = vunpack.c.h.b16 %v114
    %v995 = vunpack.c.l.b16 %v115
    %v996 = vunpack.c.h.b16 %v115
    %v997 = vunpack.c.l.b16 %v116
    %v998 = vunpack.c.h.b16 %v116
    %v999 = vunpack.c.l.b16 %v117
    %v1000 = vunpack.c.h.b16 %v117
    %v1001 = vunpack.c.l.b16 %v118
    %v1002 = vunpack.c.h.b16 %v118
    %v1003 = vunpack.c.l.b16 %v119
    %v1004 = vunpack.c.h.b16 %v119
    %v1005 = vunpack.c.l.b16 %v120
    %v1006 = vunpack.c.h.b16 %v120
    %v1007 = vunpack.c.l.b16 %v121
    %v1008 = vunpack.c.h.b16 %v121
    %v1009 = vunpack.c.l.b16 %v122
    %v1010 = vunpack.c.h.b16 %v122
    %v1011 = vunpack.c.l.b16 %v123
    %v1012 = vunpack.c.h.b16 %v123
    %v1013 = vunpack.c.l.b16 %v124
    %v1014 = vunpack.c.h.b16 %v124
    %v1015 = vunpack.c.l.b16 %v125
    %v1016 = vunpack.c.h.b16 %v125
    %v1017 = vunpack.c.l.b16 %v126
    %v1018 = vunpack.c.h.b16 %v126
    %v1019 = vunpack.c.l.b16 %v127
    %v1020 = vunpack.c.h.b16 %v127
    %v1021 = vunpack.c.l.b16 %v128
    %v1022 = vunpack.c.h.b16 %v128
    %v1023 = vunpack.c.l.b16 %v129
    %v1024 = vunpack.c.h.b16 %v129
    %v1025 = vunpack.c.l.b16 %v130
    %v1026 = vunpack.c.h.b16 %v130
    %v1027 = vunpack.c.l.b16 %v131
    %v1028 = vunpack.c.h.b16 %v131
    %v1029 = vunpack.c.l.b16 %v132
    %v1030 = vunpack.c.h.b16 %v132
    %v1031 = vunpack.c.l.b16 %v133
    %v1032 = vunpack.c.h.b16 %v133
    %v1033 = vunpack.c.l.b16 %v134
    %v1034 = vunpack.c.h.b16 %v134
    %v1035 = vunpack.c.l.b16 %v135
    %v1036 = vunpack.c.h.b16 %v135
    %v1037 = vunpack.c.l.b16 %v136
    %v1038 = vunpack.c.h.b16 %v136
    %v1039 = vunpack.c.l.b16 %v137
    %v1040 = vunpack.c.h.b16 %v137
    %v1041 = vunpack.c.l.b16 %v138
    %v1042 = vunpack.c.h.b16 %v138
    %v1043 = vunpack.c.l.b16 %v139
    %v1044 = vunpack.c.h.b16 %v139
    %v1045 = vunpack.c.l.b16 %v140
    %v1046 = vunpack.c.h.b16 %v140
    %v1047 = vunpack.c.l.b16 %v141
    %v1048 = vunpack.c.h.b16 %v141
    %v1049 = vunpack.c.l.b16 %v142
    %v1050 = vunpack.c.h.b16 %v142
    %v1051 = vunpack.c.l.b16 %v143
    %v1052 = vunpack.c.h.b16 %v143
    %v1053 = vunpack.c.l.b16 %v144
    %v1054 = vunpack.c.h.b16 %v144
    %v1055 = vunpack.c.l.b16 %v145
    %v1056 = vunpack.c.h.b16 %v145
    %v1057 = vunpack.c.l.b16 %v146
    %v1058 = vunpack.c.h.b16 %v146
    %v1059 = vunpack.c.l.b16 %v147
    %v1060 = vunpack.c.h.b16 %v147
    %v1061 = vunpack.c.l.b16 %v148
    %v1062 = vunpack.c.h.b16 %v148
    %v1063 = vunpack.c.l.b16 %v149
    %v1064 = vunpack.c.h.b16 %v149
    %v1065 = vunpack.c.l.b16 %v150
    %v1066 = vunpack.c.h.b16 %v150
    %v1067 = vunpack.c.l.b16 %v151
    %v1068 = vunpack.c.h.b16 %v151
    %v1069 = vunpack.c.l.b16 %v152
    %v1070 = vunpack.c.h.b16 %v152
    %v1071 = vunpack.c.l.b16 %v153
    %v1072 = vunpack.c.h.b16 %v153
    %v1073 = vunpack.c.l.b16 %v154
    %v1074 = vunpack.c.h.b16 %v154
    %v1075 = vunpack.c.l.b16 %v155
    %v1076 = vunpack.c.h.b16 %v155
    %v1077 = vunpack.c.l.b16 %v156
    %v1078 = vunpack.c.h.b16 %v156
    %v1079 = vunpack.c.l.b16 %v157
    %v1080 = vunpack.c.h.b16 %v157
    %v1081 = vunpack.c.l.b16 %v158
    %v1082 = vunpack.c.h.b16 %v158
    %v1083 = vunpack.c.l.b16 %v159
    %v1084 = vunpack.c.h.b16 %v159
    %v1085 = vunpack.c.l.b16 %v160
    %v1086 = vunpack.c.h.b16 %v160
    %v1087 = vunpack.c.l.b16 %v161
    %v1088 = vunpack.c.h.b16 %v161
    %v1089 = vunpack.c.l.b16 %v162
    %v1090 = vunpack.c.h.b16 %v162
    %v1091 = vunpack.c.l.b16 %v163
    %v1092 = vunpack.c.h.b16 %v163
    %v1093 = vunpack.c.l.b16 %v164
    %v1094 = vunpack.c.h.b16 %v164
    %v1095 = vunpack.c.l.b16 %v165
    %v1096 = vunpack.c.h.b16 %v165
    %v1097 = vunpack.c.l.b16 %v166
    %v1098 = vunpack.c.h.b16 %v166
    %v1099 = vunpack.c.l.b16 %v167
    %v1100 = vunpack.c.h.b16 %v167
    %v1101 = vunpack.c.l.b16 %v168
    %v1102 = vunpack.c.h.b16 %v168
    %v1103 = vunpack.c.l.b16 %v169
    %v1104 = vunpack.c.h.b16 %v169
    %v1105 = vunpack.c.l.b16 %v170
    %v1106 = vunpack.c.h.b16 %v170
    %v1107 = vunpack.c.l.b16 %v171
    %v1108 = vunpack.c.h.b16 %v171
    %v1109 = vunpack.c.l.b16 %v172
    %v1110 = vunpack.c.h.b16 %v172
    %v1111 = vunpack.c.l.b16 %v173
    %v1112 = vunpack.c.h.b16 %v173
    %v1113 = vunpack.c.l.b16 %v174
    %v1114 = vunpack.c.h.b16 %v174
    %v1115 = vunpack.c.l.b16 %v175
    %v1116 = vunpack.c.h.b16 %v175
    %v1117 = vunpack.c.l.b16 %v176
    %v1118 = vunpack.c.h.b16 %v176
    %v1119 = vunpack.c.l.b16 %v177
    %v1120 = vunpack.c.h.b16 %v177
    %v1121 = vunpack.c.l.b16 %v178
    %v1122 = vunpack.c.h.b16 %v178
    %v1123 = vunpack.c.l.b16 %v179
    %v1124 = vunpack.c.h.b16 %v179
    %v1125 = vunpack.c.l.b16 %v180
    %v1126 = vunpack.c.h.b16 %v180
    %v1127 = vunpack.c.l.b16 %v181
    %v1128 = vunpack.c.h.b16 %v181
    %v1129 = vunpack.c.l.b16 %v182
    %v1130 = vunpack.c.h.b16 %v182
    %v1131 = vunpack.c.l.b16 %v183
    %v1132 = vunpack.c.h.b16 %v183
    %v1133 = vunpack.c.l.b16 %v184
    %v1134 = vunpack.c.h.b16 %v184
    %v1135 = vunpack.c.l.b16 %v185
    %v1136 = vunpack.c.h.b16 %v185
    %v1137 = vunpack.c.l.b16 %v186
    %v1138 = vunpack.c.h.b16 %v186
    %v1139 = vunpack.c.l.b16 %v187
    %v1140 = vunpack.c.h.b16 %v187
    %v1141 = vunpack.c.l.b16 %v188
    %v1142 = vunpack.c.h.b16 %v188
    %v1143 = vunpack.c.l.b16 %v189
    %v1144 = vunpack.c.h.b16 %v189
    %v1145 = vunpack.c.l.b16 %v190
    %v1146 = vunpack.c.h.b16 %v190
    %v1147 = vunpack.c.l.b16 %v191
    %v1148 = vunpack.c.h.b16 %v191
    %v1149 = vunpack.c.l.b16 %v192
    %v1150 = vunpack.c.h.b16 %v192
    %v1151 = vunpack.c.l.b16 %v193
    %v1152 = vunpack.c.h.b16 %v193
    %v1153 = vunpack.c.l.b16 %v194
    %v1154 = vunpack.c.h.b16 %v194
    %v1155 = vunpack.c.l.b16 %v195
    %v1156 = vunpack.c.h.b16 %v195
    %v1157 = vunpack.c.l.b16 %v196
    %v1158 = vunpack.c.h.b16 %v196
    %v1159 = vunpack.c.l.b16 %v197
    %v1160 = vunpack.c.h.b16 %v197
    %v1161 = vunpack.c.l.b16 %v198
    %v1162 = vunpack.c.h.b16 %v198
    %v1163 = vunpack.c.l.b16 %v199
    %v1164 = vunpack.c.h.b16 %v199
    %v1165 = vunpack.c.l.b16 %v200
    %v1166 = vunpack.c.h.b16 %v200
    %v1167 = vunpack.c.l.b16 %v201
    %v1168 = vunpack.c.h.b16 %v201
    %v1169 = vunpack.c.l.b16 %v202
    %v1170 = vunpack.c.h.b16 %v202
    %v1171 = vunpack.c.l.b16 %v203
    %v1172 = vunpack.c.h.b16 %v203
    %v1173 = vunpack.c.l.b16 %v204
    %v1174 = vunpack.c.h.b16 %v204
    %v1175 = vunpack.c.l.b16 %v205
    %v1176 = vunpack.c.h.b16 %v205
    %v1177 = vunpack.c.l.b16 %v206
    %v1178 = vunpack.c.h.b16 %v206
    %v1179 = vunpack.c.l.b16 %v207
    %v1180 = vunpack.c.h.b16 %v207
    %v1181 = vunpack.c.l.b16 %v208
    %v1182 = vunpack.c.h.b16 %v208
    %v1183 = vunpack.c.l.b16 %v209
    %v1184 = vunpack.c.h.b16 %v209
    %v1185 = vunpack.c.l.b16 %v210
    %v1186 = vunpack.c.h.b16 %v210
    %v1187 = vunpack.c.l.b16 %v211
    %v1188 = vunpack.c.h.b16 %v211
    %v1189 = vunpack.c.l.b16 %v212
    %v1190 = vunpack.c.h.b16 %v212
    %v1191 = vunpack.c.l.b16 %v213
    %v1192 = vunpack.c.h.b16 %v213
    %v1193 = vunpack.c.l.b16 %v214
    %v1194 = vunpack.c.h.b16 %v214
    %v1195 = vunpack.c.l.b16 %v215
    %v1196 = vunpack.c.h.b16 %v215
    %v1197 = vunpack.c.l.b16 %v216
    %v1198 = vunpack.c.h.b16 %v216
    %v1199 = vunpack.c.l.b16 %v217
    %v1200 = vunpack.c.h.b16 %v217
    %v1201 = vunpack.c.l.b16 %v218
    %v1202 = vunpack.c.h.b16 %v218
    %v1203 = vunpack.c.l.b16 %v219
    %v1204 = vunpack.c.h.b16 %v219
    %v1205 = vunpack.c.l.b16 %v220
    %v1206 = vunpack.c.h.b16 %v220
    %v1207 = vunpack.c.l.b16 %v221
    %v1208 = vunpack.c.h.b16 %v221
    %v1209 = vunpack.c.l.b16 %v222
    %v1210 = vunpack.c.h.b16 %v222
    %v1211 = vunpack.c.l.b16 %v223
    %v1212 = vunpack.c.h.b16 %v223
    %v1213 = vunpack.c.l.b16 %v224
    %v1214 = vunpack.c.h.b16 %v224
    %v1215 = vunpack.c.l.b16 %v225
    %v1216 = vunpack.c.h.b16 %v225
    %v1217 = vunpack.c.l.b16 %v226
    %v1218 = vunpack.c.h.b16 %v226
    %v1219 = vunpack.c.l.b16 %v227
    %v1220 = vunpack.c.h.b16 %v227
    %v1221 = vunpack.c.l.b16 %v228
    %v1222 = vunpack.c.h.b16 %v228
    %v1223 = vunpack.c.l.b16 %v229
    %v1224 = vunpack.c.h.b16 %v229
    %v1225 = vunpack.c.l.b16 %v230
    %v1226 = vunpack.c.h.b16 %v230
    %v1227 = vunpack.c.l.b16 %v231
    %v1228 = vunpack.c.h.b16 %v231
    %v1229 = vunpack.c.l.b16 %v232
    %v1230 = vunpack.c.h.b16 %v232
    %v1231 = vunpack.c.l.b16 %v233
    %v1232 = vunpack.c.h.b16 %v233
    %v1233 = vunpack.c.l.b16 %v234
    %v1234 = vunpack.c.h.b16 %v234
    %v1235 = vunpack.c.l.b16 %v235
    %v1236 = vunpack.c.h.b16 %v235
    %v1237 = vunpack.c.l.b16 %v236
    %v1238 = vunpack.c.h.b16 %v236
    %v1239 = vunpack.c.l.b16 %v237
    %v1240 = vunpack.c.h.b16 %v237
    %v1241 = vunpack.c.l.b16 %v238
    %v1242 = vunpack.c.h.b16 %v238
    %v1243 = vunpack.c.l.b16 %v239
    %v1244 = vunpack.c.h.b16 %v239
    %v1245 = vunpack.c.l.b16 %v240
    %v1246 = vunpack.c.h.b16 %v240
    %v1247 = vunpack.c.l.b16 %v241
    %v1248 = vunpack.c.h.b16 %v241
    %v1249 = vunpack.c.l.b16 %v242
    %v1250 = vunpack.c.h.b16 %v242
    %v1251 = vunpack.c.l.b16 %v243
    %v1252 = vunpack.c.h.b16 %v243
    %v1253 = vunpack.c.l.b16 %v244
    %v1254 = vunpack.c.h.b16 %v244
    %v1255 = vunpack.c.l.b16 %v245
    %v1256 = vunpack.c.h.b16 %v245
    %v1257 = vunpack.c.l.b16 %v246
    %v1258 = vunpack.c.h.b16 %v246
    %v1259 = vunpack.c.l.b16 %v247
    %v1260 = vunpack.c.h.b16 %v247
    %v1261 = vunpack.c.l.b16 %v248
    %v1262 = vunpack.c.h.b16 %v248
    %v1263 = vunpack.c.l.b16 %v249
    %v1264 = vunpack.c.h.b16 %v249
    %v1265 = vunpack.c.l.b16 %v250
    %v1266 = vunpack.c.h.b16 %v250
    %v1267 = vunpack.c.l.b16 %v251
    %v1268 = vunpack.c.h.b16 %v251
    %v1269 = vunpack.c.l.b16 %v252
    %v1270 = vunpack.c.h.b16 %v252
    %v1271 = vunpack.c.l.b16 %v253
    %v1272 = vunpack.c.h.b16 %v253
    %v1273 = vunpack.c.l.b16 %v254
    %v1274 = vunpack.c.h.b16 %v254
    %v1275 = vunpack.c.l.b16 %v255
    %v1276 = vunpack.c.h.b16 %v255
    %v1277 = vunpack.c.l.b16 %v256
    %v1278 = vunpack.c.h.b16 %v256
    %v1279 = vunpack.c.l.b16 %v257
    %v1280 = vunpack.c.h.b16 %v257
    %v1281 = vunpack.c.l.b16 %v258
    %v1282 = vunpack.c.h.b16 %v258
    %v1283 = vunpack.c.l.b16 %v259
    %v1284 = vunpack.c.h.b16 %v259
    %v1285 = vunpack.c.l.b16 %v260
    %v1286 = vunpack.c.h.b16 %v260
    %v1287 = vunpack.c.l.b16 %v261
    %v1288 = vunpack.c.h.b16 %v261
    %v1289 = vunpack.c.l.b16 %v262
    %v1290 = vunpack.c.h.b16 %v262
    %v1291 = vunpack.c.l.b16 %v263
    %v1292 = vunpack.c.h.b16 %v263
    %v1293 = vunpack.c.l.b16 %v264
    %v1294 = vunpack.c.h.b16 %v264
    %v1295 = vunpack.c.l.b16 %v265
    %v1296 = vunpack.c.h.b16 %v265
    %v1297 = vunpack.c.l.b16 %v266
    %v1298 = vunpack.c.h.b16 %v266
    %v1299 = vunpack.c.l.b16 %v267
    %v1300 = vunpack.c.h.b16 %v267
    %v1301 = vunpack.c.l.b16 %v268
    %v1302 = vunpack.c.h.b16 %v268
    %v1303 = vunpack.c.l.b16 %v269
    %v1304 = vunpack.c.h.b16 %v269
    %v1305 = vunpack.c.l.b16 %v270
    %v1306 = vunpack.c.h.b16 %v270
    %v1307 = vunpack.c.l.b16 %v271
    %v1308 = vunpack.c.h.b16 %v271
    %v1309 = vunpack.c.l.b16 %v272
    %v1310 = vunpack.c.h.b16 %v272
    %v1311 = vunpack.c.l.b16 %v273
    %v1312 = vunpack.c.h.b16 %v273
    %v1313 = vunpack.c.l.b16 %v274
    %v1314 = vunpack.c.h.b16 %v274
    %v1315 = vunpack.c.l.b16 %v275
    %v1316 = vunpack.c.h.b16 %v275
    %v1317 = vunpack.c.l.b16 %v276
    %v1318 = vunpack.c.h.b16 %v276
    %v1319 = vunpack.c.l.b16 %v277
    %v1320 = vunpack.c.h.b16 %v277
    %v1321 = vunpack.c.l.b16 %v278
    %v1322 = vunpack.c.h.b16 %v278
    %v1323 = vunpack.c.l.b16 %v279
    %v1324 = vunpack.c.h.b16 %v279
    %v1325 = vunpack.c.l.b16 %v280
    %v1326 = vunpack.c.h.b16 %v280
    %v1327 = vunpack.c.l.b16 %v281
    %v1328 = vunpack.c.h.b16 %v281
    %v1329 = vunpack.c.l.b16 %v282
    %v1330 = vunpack.c.h.b16 %v282
    %v1331 = vunpack.c.l.b16 %v283
    %v1332 = vunpack.c.h.b16 %v283
    %v1333 = vunpack.c.l.b16 %v284
    %v1334 = vunpack.c.h.b16 %v284
    %v1335 = vunpack.c.l.b16 %v285
    %v1336 = vunpack.c.h.b16 %v285
    %v1337 = vunpack.c.l.b16 %v286
    %v1338 = vunpack.c.h.b16 %v286
    %v1339 = vunpack.c.l.b16 %v287
    %v1340 = vunpack.c.h.b16 %v287
    %v1341 = vunpack.c.l.b16 %v288
    %v1342 = vunpack.c.h.b16 %v288
    %v1343 = vunpack.c.l.b16 %v289
    %v1344 = vunpack.c.h.b16 %v289
    %v1345 = vunpack.c.l.b16 %v290
    %v1346 = vunpack.c.h.b16 %v290
    %v1347 = vunpack.c.l.b16 %v291
    %v1348 = vunpack.c.h.b16 %v291
    %v1349 = vunpack.c.l.b16 %v292
    %v1350 = vunpack.c.h.b16 %v292
    %v1351 = vunpack.c.l.b16 %v293
    %v1352 = vunpack.c.h.b16 %v293
    %v1353 = vunpack.c.l.b16 %v294
    %v1354 = vunpack.c.h.b16 %v294
    %v1355 = vunpack.c.l.b16 %v295
    %v1356 = vunpack.c.h.b16 %v295
    %v1357 = vunpack.c.l.b16 %v296
    %v1358 = vunpack.c.h.b16 %v296
    %v1359 = vunpack.c.l.b16 %v297
    %v1360 = vunpack.c.h.b16 %v297
    %v1361 = vunpack.c.l.b16 %v298
    %v1362 = vunpack.c.h.b16 %v298
    %v1363 = vunpack.c.l.b16 %v299
    %v1364 = vunpack.c.h.b16 %v299
    %v1365 = vunpack.c.l.b16 %v300
    %v1366 = vunpack.c.h.b16 %v300
    %v1367 = vunpack.c.l.b16 %v301
    %v1368 = vunpack.c.h.b16 %v301
    %v1369 = vunpack.c.l.b16 %v302
    %v1370 = vunpack.c.h.b16 %v302
    %v1371 = vunpack.c.l.b16 %v303
    %v1372 = vunpack.c.h.b16 %v303
    %v1373 = vunpack.c.l.b16 %v304
    %v1374 = vunpack.c.h.b16 %v304
    %v1375 = vunpack.c.l.b16 %v305
    %v1376 = vunpack.c.h.b16 %v305
    %v1377 = vunpack.c.l.b16 %v306
    %v1378 = vunpack.c.h.b16 %v306
    %v1379 = vunpack.c.l.b16 %v307
    %v1380 = vunpack.c.h.b16 %v307
    %v1381 = vunpack.c.l.b16 %v308
    %v1382 = vunpack.c.h.b16 %v308
    %v1383 = vunpack.c.l.b16 %v309
    %v1384 = vunpack.c.h.b16 %v309
    %v1385 = vunpack.c.l.b16 %v310
    %v1386 = vunpack.c.h.b16 %v310
    %v1387 = vunpack.c.l.b16 %v311
    %v1388 = vunpack.c.h.b16 %v311
    %v1389 = vunpack.c.l.b16 %v312
    %v1390 = vunpack.c.h.b16 %v312
    %v1391 = vunpack.c.l.b16 %v313
    %v1392 = vunpack.c.h.b16 %v313
    %v1393 = vunpack.c.l.b16 %v314
    %v1394 = vunpack.c.h.b16 %v314
    %v1395 = vunpack.c.l.b16 %v315
    %v1396 = vunpack.c.h.b16 %v315
    %v1397 = vunpack.c.l.b16 %v316
    %v1398 = vunpack.c.h.b16 %v316
    %v1399 = vunpack.c.l.b16 %v317
    %v1400 = vunpack.c.h.b16 %v317
    %v1401 = vunpack.c.l.b16 %v318
    %v1402 = vunpack.c.h.b16 %v318
    %v1403 = vunpack.c.l.b16 %v319
    %v1404 = vunpack.c.h.b16 %v319
    %v1405 = vunpack.c.l.b16 %v320
    %v1406 = vunpack.c.h.b16 %v320
    %v1407 = vunpack.c.l.b16 %v321
    %v1408 = vunpack.c.h.b16 %v321
    %v1409 = vunpack.c.l.b16 %v322
    %v1410 = vunpack.c.h.b16 %v322
    %v1411 = vunpack.c.l.b16 %v323
    %v1412 = vunpack.c.h.b16 %v323
    %v1413 = vunpack.c.l.b16 %v324
    %v1414 = vunpack.c.h.b16 %v324
    %v1415 = vunpack.c.l.b16 %v325
    %v1416 = vunpack.c.h.b16 %v325
    %v1417 = vunpack.c.l.b16 %v326
    %v1418 = vunpack.c.h.b16 %v326
    %v1419 = vunpack.c.l.b16 %v327
    %v1420 = vunpack.c.h.b16 %v327
    %v1421 = vunpack.c.l.b16 %v328
    %v1422 = vunpack.c.h.b16 %v328
    %v1423 = vunpack.c.l.b16 %v329
    %v1424 = vunpack.c.h.b16 %v329
    %v1425 = vunpack.c.l.b16 %v330
    %v1426 = vunpack.c.h.b16 %v330
    %v1427 = vunpack.c.l.b16 %v331
    %v1428 = vunpack.c.h.b16 %v331
    %v1429 = vunpack.c.l.b16 %v332
    %v1430 = vunpack.c.h.b16 %v332
    %v1431 = vunpack.c.l.b16 %v333
    %v1432 = vunpack.c.h.b16 %v333
    %v1433 = vunpack.c.l.b16 %v334
    %v1434 = vunpack.c.h.b16 %v334
    %v1435 = vunpack.c.l.b16 %v335
    %v1436 = vunpack.c.h.b16 %v335
    %v1437 = vunpack.c.l.b16 %v336
    %v1438 = vunpack.c.h.b16 %v336
    %v1439 = vunpack.c.l.b16 %v337
    %v1440 = vunpack.c.h.b16 %v337
    %v1441 = vunpack.c.l.b16 %v338
    %v1442 = vunpack.c.h.b16 %v338
    %v1443 = vunpack.c.l.b16 %v339
    %v1444 = vunpack.c.h.b16 %v339
    %v1445 = vunpack.c.l.b16 %v340
    %v1446 = vunpack.c.h.b16 %v340
    %v1447 = vunpack.c.l.b16 %v341
    %v1448 = vunpack.c.h.b16 %v341
    %v1449 = vunpack.c.l.b16 %v342
    %v1450 = vunpack.c.h.b16 %v342
    %v1451 = vunpack.c.l.b16 %v343
    %v1452 = vunpack.c.h.b16 %v343
    %v1453 = vunpack.c.l.b16 %v344
    %v1454 = vunpack.c.h.b16 %v344
    %v1455 = vunpack.c.l.b16 %v345
    %v1456 = vunpack.c.h.b16 %v345
    %v1457 = vunpack.c.l.b16 %v346
    %v1458 = vunpack.c.h.b16 %v346
    %v1459 = vunpack.c.l.b16 %v347
    %v1460 = vunpack.c.h.b16 %v347
    %v1461 = vunpack.c.l.b16 %v348
    %v1462 = vunpack.c.h.b16 %v348
    %v1463 = vunpack.c.l.b16 %v349
    %v1464 = vunpack.c.h.b16 %v349
    %v1465 = vunpack.c.l.b16 %v350
    %v1466 = vunpack.c.h.b16 %v350
    %v1467 = vunpack.c.l.b16 %v351
    %v1468 = vunpack.c.h.b16 %v351
    %v1469 = vunpack.c.l.b16 %v352
    %v1470 = vunpack.c.h.b16 %v352
    %v1471 = vunpack.c.l.b16 %v353
    %v1472 = vunpack.c.h.b16 %v353
    %v1473 = vunpack.c.l.b16 %v354
    %v1474 = vunpack.c.h.b16 %v354
    %v1475 = vunpack.c.l.b16 %v355
    %v1476 = vunpack.c.h.b16 %v355
    %v1477 = vunpack.c.l.b16 %v356
    %v1478 = vunpack.c.h.b16 %v356
    %v1479 = vunpack.c.l.b16 %v357
    %v1480 = vunpack.c.h.b16 %v357
    %v1481 = vunpack.c.l.b16 %v358
    %v1482 = vunpack.c.h.b16 %v358
    %v1483 = vunpack.c.l.b16 %v359
    %v1484 = vunpack.c.h.b16 %v359
    %v1485 = vunpack.c.l.b16 %v360
    %v1486 = vunpack.c.h.b16 %v360
    %v1487 = vunpack.c.l.b16 %v361
    %v1488 = vunpack.c.h.b16 %v361
    %v1489 = vunpack.c.l.b16 %v362
    %v1490 = vunpack.c.h.b16 %v362
    %v1491 = vunpack.c.l.b16 %v363
    %v1492 = vunpack.c.h.b16 %v363
    %v1493 = vunpack.c.l.b16 %v364
    %v1494 = vunpack.c.h.b16 %v364
    %v1495 = vunpack.c.l.b16 %v365
    %v1496 = vunpack.c.h.b16 %v365
    %v1497 = vunpack.c.l.b16 %v366
    %v1498 = vunpack.c.h.b16 %v366
    %v1499 = vunpack.c.l.b16 %v367
    %v1500 = vunpack.c.h.b16 %v367
    %v1501 = vunpack.c.l.b16 %v368
    %v1502 = vunpack.c.h.b16 %v368
    %v1503 = vunpack.c.l.b16 %v369
    %v1504 = vunpack.c.h.b16 %v369
    %v1505 = vunpack.c.l.b16 %v370
    %v1506 = vunpack.c.h.b16 %v370
    %v1507 = vunpack.c.l.b16 %v371
    %v1508 = vunpack.c.h.b16 %v371
    %v1509 = vunpack.c.l.b16 %v372
    %v1510 = vunpack.c.h.b16 %v372
    %v1511 = vunpack.c.l.b16 %v373
    %v1512 = vunpack.c.h.b16 %v373
    %v1513 = vunpack.c.l.b16 %v374
    %v1514 = vunpack.c.h.b16 %v374
    %v1515 = vunpack.c.l.b16 %v375
    %v1516 = vunpack.c.h.b16 %v375
    %v1517 = vunpack.c.l.b16 %v376
    %v1518 = vunpack.c.h.b16 %v376
    %v1519 = vunpack.c.l.b16 %v377
    %v1520 = vunpack.c.h.b16 %v377
    %v1521 = vunpack.c.l.b16 %v378
    %v1522 = vunpack.c.h.b16 %v378
    %v1523 = vunpack.c.l.b16 %v379
    %v1524 = vunpack.c.h.b16 %v379
    %v1525 = vunpack.c.l.b16 %v380
    %v1526 = vunpack.c.h.b16 %v380
    %v1527 = vunpack.c.l.b16 %v381
    %v1528 = vunpack.c.h.b16 %v381
    %v1529 = vunpack.c.l.b16 %v382
    %v1530 = vunpack.c.h.b16 %v382
    %v1531 = vunpack.c.l.b16 %v383
    %v1532 = vunpack.c.h.b16 %v383
    %v1533 = vunpack.c.l.b16 %v384
    %v1534 = vunpack.c.h.b16 %v384
    %v1535 = vunpack.c.l.b16 %v385
    %v1536 = vunpack.c.h.b16 %v385
    %v1537 = vunpack.c.l.b16 %v386
    %v1538 = vunpack.c.h.b16 %v386
    %v1539 = vunpack.c.l.b16 %v387
    %v1540 = vunpack.c.h.b16 %v387
    %v1541 = vunpack.c.l.b16 %v388
    %v1542 = vunpack.c.h.b16 %v388
    %v1543 = vunpack.c.l.b16 %v389
    %v1544 = vunpack.c.h.b16 %v389
    %v1545 = vunpack.c.l.b16 %v390
    %v1546 = vunpack.c.h.b16 %v390
    %v1547 = vunpack.c.l.b16 %v391
    %v1548 = vunpack.c.h.b16 %v391
    %v1549 = vunpack.c.l.b16 %v392
    %v1550 = vunpack.c.h.b16 %v392
    %v1551 = vunpack.c.l.b16 %v393
    %v1552 = vunpack.c.h.b16 %v393
    %v1553 = vunpack.c.l.b16 %v394
    %v1554 = vunpack.c.h.b16 %v394
    %v1555 = vunpack.c.l.b16 %v395
    %v1556 = vunpack.c.h.b16 %v395
    %v1557 = vunpack.c.l.b16 %v396
    %v1558 = vunpack.c.h.b16 %v396
    %v1559 = vunpack.c.l.b16 %v397
    %v1560 = vunpack.c.h.b16 %v397
    %v1561 = vunpack.c.l.b16 %v398
    %v1562 = vunpack.c.h.b16 %v398
    %v1563 = vunpack.c.l.b16 %v399
    %v1564 = vunpack.c.h.b16 %v399
    %v1565 = vunpack.c.l.b16 %v400
    %v1566 = vunpack.c.h.b16 %v400
    %v1567 = vunpack.c.l.b16 %v401
    %v1568 = vunpack.c.h.b16 %v401
    %v1569 = vunpack.c.l.b16 %v402
    %v1570 = vunpack.c.h.b16 %v402
    %v1571 = vunpack.c.l.b16 %v403
    %v1572 = vunpack.c.h.b16 %v403
    %v1573 = vunpack.c.l.b16 %v404
    %v1574 = vunpack.c.h.b16 %v404
    %v1575 = vunpack.c.l.b16 %v405
    %v1576 = vunpack.c.h.b16 %v405
    %v1577 = vunpack.c.l.b16 %v406
    %v1578 = vunpack.c.h.b16 %v406
    %v1579 = vunpack.c.l.b16 %v407
    %v1580 = vunpack.c.h.b16 %v407
    %v1581 = vunpack.c.l.b16 %v408
    %v1582 = vunpack.c.h.b16 %v408
    %v1583 = vunpack.c.l.b16 %v409
    %v1584 = vunpack.c.h.b16 %v409
    %v1585 = vunpack.c.l.b16 %v410
    %v1586 = vunpack.c.h.b16 %v410
    %v1587 = vunpack.c.l.b16 %v411
    %v1588 = vunpack.c.h.b16 %v411
    %v1589 = vunpack.c.l.b16 %v412
    %v1590 = vunpack.c.h.b16 %v412
    %v1591 = vunpack.c.l.b16 %v413
    %v1592 = vunpack.c.h.b16 %v413
    %v1593 = vunpack.c.l.b16 %v414
    %v1594 = vunpack.c.h.b16 %v414
    %v1595 = vunpack.c.l.b16 %v415
    %v1596 = vunpack.c.h.b16 %v415
    %v1597 = vunpack.c.l.b16 %v416
    %v1598 = vunpack.c.h.b16 %v416
    %v1599 = vunpack.c.l.b16 %v417
    %v1600 = vunpack.c.h.b16 %v417
    %v1601 = vunpack.c.l.b16 %v418
    %v1602 = vunpack.c.h.b16 %v418
    %v1603 = vunpack.c.l.b16 %v419
    %v1604 = vunpack.c.h.b16 %v419
    %v1605 = vunpack.c.l.b16 %v420
    %v1606 = vunpack.c.h.b16 %v420
    %v1607 = vunpack.c.l.b16 %v421
    %v1608 = vunpack.c.h.b16 %v421
    %v1609 = vunpack.c.l.b16 %v422
    %v1610 = vunpack.c.h.b16 %v422
    %v1611 = vunpack.c.l.b16 %v423
    %v1612 = vunpack.c.h.b16 %v423
    %v1613 = vunpack.c.l.b16 %v424
    %v1614 = vunpack.c.h.b16 %v424
    %v1615 = vunpack.c.l.b16 %v425
    %v1616 = vunpack.c.h.b16 %v425
    %v1617 = vunpack.c.l.b16 %v426
    %v1618 = vunpack.c.h.b16 %v426
    %v1619 = vunpack.c.l.b16 %v427
    %v1620 = vunpack.c.h.b16 %v427
    %v1621 = vunpack.c.l.b16 %v428
    %v1622 = vunpack.c.h.b16 %v428
    %v1623 = vunpack.c.l.b16 %v429
    %v1624 = vunpack.c.h.b16 %v429
    %v1625 = vunpack.c.l.b16 %v430
    %v1626 = vunpack.c.h.b16 %v430
    %v1627 = vunpack.c.l.b16 %v431
    %v1628 = vunpack.c.h.b16 %v431
    %v1629 = vunpack.c.l.b16 %v432
    %v1630 = vunpack.c.h.b16 %v432
    %v1631 = vunpack.c.l.b16 %v433
    %v1632 = vunpack.c.h.b16 %v433
    %v1633 = vunpack.c.l.b16 %v434
    %v1634 = vunpack.c.h.b16 %v434
    %v1635 = vunpack.c.l.b16 %v435
    %v1636 = vunpack.c.h.b16 %v435
    %v1637 = vunpack.c.l.b16 %v436
    %v1638 = vunpack.c.h.b16 %v436
    %v1639 = vunpack.c.l.b16 %v437
    %v1640 = vunpack.c.h.b16 %v437
    %v1641 = vunpack.c.l.b16 %v438
    %v1642 = vunpack.c.h.b16 %v438
    %v1643 = vunpack.c.l.b16 %v439
    %v1644 = vunpack.c.h.b16 %v439
    %v1645 = vunpack.c.l.b16 %v440
    %v1646 = vunpack.c.h.b16 %v440
    %v1647 = vunpack.c.l.b16 %v441
    %v1648 = vunpack.c.h.b16 %v441
    %v1649 = vunpack.c.l.b16 %v442
    %v1650 = vunpack.c.h.b16 %v442
    %v1651 = vunpack.c.l.b16 %v443
    %v1652 = vunpack.c.h.b16 %v443
    %v1653 = vunpack.c.l.b16 %v444
    %v1654 = vunpack.c.h.b16 %v444
    %v1655 = vunpack.c.l.b16 %v445
    %v1656 = vunpack.c.h.b16 %v445
    %v1657 = vunpack.c.l.b16 %v446
    %v1658 = vunpack.c.h.b16 %v446
    %v1659 = vunpack.c.l.b16 %v447
    %v1660 = vunpack.c.h.b16 %v447
    %v1661 = vunpack.c.l.b16 %v448
    %v1662 = vunpack.c.h.b16 %v448
    %v1663 = vunpack.c.l.b16 %v449
    %v1664 = vunpack.c.h.b16 %v449
    %v1665 = vunpack.c.l.b16 %v450
    %v1666 = vunpack.c.h.b16 %v450
    %v1667 = vunpack.c.l.b16 %v451
    %v1668 = vunpack.c.h.b16 %v451
    %v1669 = vunpack.c.l.b16 %v452
    %v1670 = vunpack.c.h.b16 %v452
    %v1671 = vunpack.c.l.b16 %v453
    %v1672 = vunpack.c.h.b16 %v453
    %v1673 = vunpack.c.l.b16 %v454
    %v1674 = vunpack.c.h.b16 %v454
    %v1675 = vunpack.c.l.b16 %v455
    %v1676 = vunpack.c.h.b16 %v455
    %v1677 = vunpack.c.l.b16 %v456
    %v1678 = vunpack.c.h.b16 %v456
    %v1679 = vunpack.c.l.b16 %v457
    %v1680 = vunpack.c.h.b16 %v457
    %v1681 = vunpack.c.l.b16 %v458
    %v1682 = vunpack.c.h.b16 %v458
    %v1683 = vunpack.c.l.b16 %v459
    %v1684 = vunpack.c.h.b16 %v459
    %v1685 = vunpack.c.l.b16 %v460
    %v1686 = vunpack.c.h.b16 %v460
    %v1687 = vunpack.c.l.b16 %v461
    %v1688 = vunpack.c.h.b16 %v461
    %v1689 = vunpack.c.l.b16 %v462
    %v1690 = vunpack.c.h.b16 %v462
    %v1691 = vunpack.c.l.b16 %v463
    %v1692 = vunpack.c.h.b16 %v463
    %v1693 = vunpack.c.l.b16 %v464
    %v1694 = vunpack.c.h.b16 %v464
    %v1695 = vunpack.c.l.b16 %v465
    %v1696 = vunpack.c.h.b16 %v465
    %v1697 = vunpack.c.l.b16 %v466
    %v1698 = vunpack.c.h.b16 %v466
    %v1699 = vunpack.c.l.b16 %v467
    %v1700 = vunpack.c.h.b16 %v467
    %v1701 = vunpack.c.l.b16 %v468
    %v1702 = vunpack.c.h.b16 %v468
    %v1703 = vpack.c.b16 %v939, %v935
    %v1704 = vpack.c.b16 %v940, %v936
    %v1705 = vpack.c.b16 %v941, %v937
    %v1706 = vpack.c.b16 %v942, %v938
    %v1707 = vpack.c.b16 %v947, %v943
    %v1708 = vpack.c.b16 %v948, %v944
    %v1709 = vpack.c.b16 %v949, %v945
    %v1710 = vpack.c.b16 %v950, %v946
    %v1711 = vpack.c.b16 %v955, %v951
    %v1712 = vpack.c.b16 %v956, %v952
    %v1713 = vpack.c.b16 %v957, %v953
    %v1714 = vpack.c.b16 %v958, %v954
    %v1715 = vpack.c.b16 %v963, %v959
    %v1716 = vpack.c.b16 %v964, %v960
    %v1717 = vpack.c.b16 %v965, %v961
    %v1718 = vpack.c.b16 %v966, %v962
    %v1719 = vpack.c.b16 %v971, %v967
    %v1720 = vpack.c.b16 %v972, %v968
    %v1721 = vpack.c.b16 %v973, %v969
    %v1722 = vpack.c.b16 %v974, %v970
    %v1723 = vpack.c.b16 %v979, %v975
    %v1724 = vpack.c.b16 %v980, %v976
    %v1725 = vpack.c.b16 %v981, %v977
    %v1726 = vpack.c.b16 %v982, %v978
    %v1727 = vpack.c.b16 %v987, %v983
    %v1728 = vpack.c.b16 %v988, %v984
    %v1729 = vpack.c.b16 %v989, %v985
    %v1730 = vpack.c.b16 %v990, %v986
    %v1731 = vpack.c.b16 %v995, %v991
    %v1732 = vpack.c.b16 %v996, %v992
    %v1733 = vpack.c.b16 %v997, %v993
    %v1734 = vpack.c.b16 %v998, %v994
    %v1735 = vpack.c.b16 %v1003, %v999
    %v1736 = vpack.c.b16 %v1004, %v1000
    %v1737 = vpack.c.b16 %v1005, %v1001
    %v1738 = vpack.c.b16 %v1006, %v1002
    %v1739 = vpack.c.b16 %v1011, %v1007
    %v1740 = vpack.c.b16 %v1012, %v1008
    %v1741 = vpack.c.b16 %v1013, %v1009
    %v1742 = vpack.c.b16 %v1014, %v1010
    %v1743 = vpack.c.b16 %v1019, %v1015
    %v1744 = vpack.c.b16 %v1020, %v1016
    %v1745 = vpack.c.b16 %v1021, %v1017
    %v1746 = vpack.c.b16 %v1022, %v1018
    %v1747 = vpack.c.b16 %v1027, %v1023
    %v1748 = vpack.c.b16 %v1028, %v1024
    %v1749 = vpack.c.b16 %v1029, %v1025
    %v1750 = vpack.c.b16 %v1030, %v1026
    %v1751 = vpack.c.b16 %v1035, %v1031
    %v1752 = vpack.c.b16 %v1036, %v1032
    %v1753 = vpack.c.b16 %v1037, %v1033
    %v1754 = vpack.c.b16 %v1038, %v1034
    %v1755 = vpack.c.b16 %v1043, %v1039
    %v1756 = vpack.c.b16 %v1044, %v1040
    %v1757 = vpack.c.b16 %v1045, %v1041
    %v1758 = vpack.c.b16 %v1046, %v1042
    %v1759 = vpack.c.b16 %v1051, %v1047
    %v1760 = vpack.c.b16 %v1052, %v1048
    %v1761 = vpack.c.b16 %v1053, %v1049
    %v1762 = vpack.c.b16 %v1054, %v1050
    %v1763 = vpack.c.b16 %v1059, %v1055
    %v1764 = vpack.c.b16 %v1060, %v1056
    %v1765 = vpack.c.b16 %v1061, %v1057
    %v1766 = vpack.c.b16 %v1062, %v1058
    %v1767 = vpack.c.b16 %v1067, %v1063
    %v1768 = vpack.c.b16 %v1068, %v1064
    %v1769 = vpack.c.b16 %v1069, %v1065
    %v1770 = vpack.c.b16 %v1070, %v1066
    %v1771 = vpack.c.b16 %v1075, %v1071
    %v1772 = vpack.c.b16 %v1076, %v1072
    %v1773 = vpack.c.b16 %v1077, %v1073
    %v1774 = vpack.c.b16 %v1078, %v1074
    %v1775 = vpack.c.b16 %v1083, %v1079
    %v1776 = vpack.c.b16 %v1084, %v1080
    %v1777 = vpack.c.b16 %v1085, %v1081
    %v1778 = vpack.c.b16 %v1086, %v1082
    %v1779 = vpack.c.b16 %v1091, %v1087
    %v1780 = vpack.c.b16 %v1092, %v1088
    %v1781 = vpack.c.b16 %v1093, %v1089
    %v1782 = vpack.c.b16 %v1094, %v1090
    %v1783 = vpack.c.b16 %v1099, %v1095
    %v1784 = vpack.c.b16 %v1100, %v1096
    %v1785 = vpack.c.b16 %v1101, %v1097
    %v1786 = vpack.c.b16 %v1102, %v1098
    %v1787 = vpack.c.b16 %v1107, %v1103
    %v1788 = vpack.c.b16 %v1108, %v1104
    %v1789 = vpack.c.b16 %v1109, %v1105
    %v1790 = vpack.c.b16 %v1110, %v1106
    %v1791 = vpack.c.b16 %v1115, %v1111
    %v1792 = vpack.c.b16 %v1116, %v1112
    %v1793 = vpack.c.b16 %v1117, %v1113
    %v1794 = vpack.c.b16 %v1118, %v1114
    %v1795 = vpack.c.b16 %v1123, %v1119
    %v1796 = vpack.c.b16 %v1124, %v1120
    %v1797 = vpack.c.b16 %v1125, %v1121
    %v1798 = vpack.c.b16 %v1126, %v1122
    %v1799 = vpack.c.b16 %v1131, %v1127
    %v1800 = vpack.c.b16 %v1132, %v1128
    %v1801 = vpack.c.b16 %v1133, %v1129
    %v1802 = vpack.c.b16 %v1134, %v1130
    %v1803 = vpack.c.b16 %v1139, %v1135
    %v1804 = vpack.c.b16 %v1140, %v1136
    %v1805 = vpack.c.b16 %v1141, %v1137
    %v1806 = vpack.c.b16 %v1142, %v1138
    %v1807 = vpack.c.b16 %v1147, %v1143
    %v1808 = vpack.c.b16 %v1148, %v1144
    %v1809 = vpack.c.b16 %v1149, %v1145
    %v1810 = vpack.c.b16 %v1150, %v1146
    %v1811 = vpack.c.b16 %v1155, %v1151
    %v1812 = vpack.c.b16 %v1156, %v1152
    %v1813 = vpack.c.b16 %v1157, %v1153
    %v1814 = vpack.c.b16 %v1158, %v1154
    %v1815 = vpack.c.b16 %v1163, %v1159
    %v1816 = vpack.c.b16 %v1164, %v1160
    %v1817 = vpack.c.b16 %v1165, %v1161
    %v1818 = vpack.c.b16 %v1166, %v1162
    %v1819 = vpack.c.b16 %v1171, %v1167
    %v1820 = vpack.c.b16 %v1172, %v1168
    %v1821 = vpack.c.b16 %v1173, %v1169
    %v1822 = vpack.c.b16 %v1174, %v1170
    %v1823 = vpack.c.b16 %v1179, %v1175
    %v1824 = vpack.c.b16 %v1180, %v1176
    %v1825 = vpack.c.b16 %v1181, %v1177
    %v1826 = vpack.c.b16 %v1182, %v1178
    %v1827 = vpack.c.b16 %v1187, %v1183
    %v1828 = vpack.c.b16 %v1188, %v1184
    %v1829 = vpack.c.b16 %v1189, %v1185
    %v1830 = vpack.c.b16 %v1190, %v1186
    %v1831 = vpack.c.b16 %v1195, %v1191
    %v1832 = vpack.c.b16 %v1196, %v1192
    %v1833 = vpack.c.b16 %v1197, %v1193
    %v1834 = vpack.c.b16 %v1198, %v1194
    %v1835 = vpack.c.b16 %v1203, %v1199
    %v1836 = vpack.c.b16 %v1204, %v1200
    %v1837 = vpack.c.b16 %v1205, %v1201
    %v1838 = vpack.c.b16 %v1206, %v1202
    %v1839 = vpack.c.b16 %v1211, %v1207
    %v1840 = vpack.c.b16 %v1212, %v1208
    %v1841 = vpack.c.b16 %v1213, %v1209
    %v1842 = vpack.c.b16 %v1214, %v1210
    %v1843 = vpack.c.b16 %v1219, %v1215
    %v1844 = vpack.c.b16 %v1220, %v1216
    %v1845 = vpack.c.b16 %v1221, %v1217
    %v1846 = vpack.c.b16 %v1222, %v1218
    %v1847 = vpack.c.b16 %v1227, %v1223
    %v1848 = vpack.c.b16 %v1228, %v1224
    %v1849 = vpack.c.b16 %v1229, %v1225
    %v1850 = vpack.c.b16 %v1230, %v1226
    %v1851 = vpack.c.b16 %v1235, %v1231
    %v1852 = vpack.c.b16 %v1236, %v1232
    %v1853 = vpack.c.b16 %v1237, %v1233
    %v1854 = vpack.c.b16 %v1238, %v1234
    %v1855 = vpack.c.b16 %v1243, %v1239
    %v1856 = vpack.c.b16 %v1244, %v1240
    %v1857 = vpack.c.b16 %v1245, %v1241
    %v1858 = vpack.c.b16 %v1246, %v1242
    %v1859 = vpack.c.b16 %v1251, %v1247
    %v1860 = vpack.c.b16 %v1252, %v1248
    %v1861 = vpack.c.b16 %v1253, %v1249
    %v1862 = vpack.c.b16 %v1254, %v1250
    %v1863 = vpack.c.b16 %v1259, %v1255
    %v1864 = vpack.c.b16 %v1260, %v1256
    %v1865 = vpack.c.b16 %v1261, %v1257
    %v1866 = vpack.c.b16 %v1262, %v1258
    %v1867 = vpack.c.b16 %v1267, %v1263
    %v1868 = vpack.c.b16 %v1268, %v1264
    %v1869 = vpack.c.b16 %v1269, %v1265
    %v1870 = vpack.c.b16 %v1270, %v1266
    %v1871 = vpack.c.b16 %v1275, %v1271
    %v1872 = vpack.c.b16 %v1276, %v1272
    %v1873 = vpack.c.b16 %v1277, %v1273
    %v1874 = vpack.c.b16 %v1278, %v1274
    %v1875 = vpack.c.b16 %v1283, %v1279
    %v1876 = vpack.c.b16 %v1284, %v1280
    %v1877 = vpack.c.b16 %v1285, %v1281
    %v1878 = vpack.c.b16 %v1286, %v1282
    %v1879 = vpack.c.b16 %v1291, %v1287
    %v1880 = vpack.c.b16 %v1292, %v1288
    %v1881 = vpack.c.b16 %v1293, %v1289
    %v1882 = vpack.c.b16 %v1294, %v1290
    %v1883 = vpack.c.b16 %v1299, %v1295
    %v1884 = vpack.c.b16 %v1300, %v1296
    %v1885 = vpack.c.b16 %v1301, %v1297
    %v1886 = vpack.c.b16 %v1302, %v1298
    %v1887 = vpack.c.b16 %v1307, %v1303
    %v1888 = vpack.c.b16 %v1308, %v1304
    %v1889 = vpack.c.b16 %v1309, %v1305
    %v1890 = vpack.c.b16 %v1310, %v1306
    %v1891 = vpack.c.b16 %v1315, %v1311
    %v1892 = vpack.c.b16 %v1316, %v1312
    %v1893 = vpack.c.b16 %v1317, %v1313
    %v1894 = vpack.c.b16 %v1318, %v1314
    %v1895 = vpack.c.b16 %v1323, %v1319
    %v1896 = vpack.c.b16 %v1324, %v1320
    %v1897 = vpack.c.b16 %v1325, %v1321
    %v1898 = vpack.c.b16 %v1326, %v1322
    %v1899 = vpack.c.b16 %v1331, %v1327
    %v1900 = vpack.c.b16 %v1332, %v1328
    %v1901 = vpack.c.b16 %v1333, %v1329
    %v1902 = vpack.c.b16 %v1334, %v1330
    %v1903 = vpack.c.b16 %v1339, %v1335
    %v1904 = vpack.c.b16 %v1340, %v1336
    %v1905 = vpack.c.b16 %v1341, %v1337
    %v1906 = vpack.c.b16 %v1342, %v1338
    %v1907 = vpack.c.b16 %v1347, %v1343
    %v1908 = vpack.c.b16 %v1348, %v1344
    %v1909 = vpack.c.b16 %v1349, %v1345
    %v1910 = vpack.c.b16 %v1350, %v1346
    %v1911 = vpack.c.b16 %v1355, %v1351
    %v1912 = vpack.c.b16 %v1356, %v1352
    %v1913 = vpack.c.b16 %v1357, %v1353
    %v1914 = vpack.c.b16 %v1358, %v1354
    %v1915 = vpack.c.b16 %v1363, %v1359
    %v1916 = vpack.c.b16 %v1364, %v1360
    %v1917 = vpack.c.b16 %v1365, %v1361
    %v1918 = vpack.c.b16 %v1366, %v1362
    %v1919 = vpack.c.b16 %v1371, %v1367
    %v1920 = vpack.c.b16 %v1372, %v1368
    %v1921 = vpack.c.b16 %v1373, %v1369
    %v1922 = vpack.c.b16 %v1374, %v1370
    %v1923 = vpack.c.b16 %v1379, %v1375
    %v1924 = vpack.c.b16 %v1380, %v1376
    %v1925 = vpack.c.b16 %v1381, %v1377
    %v1926 = vpack.c.b16 %v1382, %v1378
    %v1927 = vpack.c.b16 %v1387, %v1383
    %v1928 = vpack.c.b16 %v1388, %v1384
    %v1929 = vpack.c.b16 %v1389, %v1385
    %v1930 = vpack.c.b16 %v1390, %v1386
    %v1931 = vpack.c.b16 %v1395, %v1391
    %v1932 = vpack.c.b16 %v1396, %v1392
    %v1933 = vpack.c.b16 %v1397, %v1393
    %v1934 = vpack.c.b16 %v1398, %v1394
    %v1935 = vpack.c.b16 %v1403, %v1399
    %v1936 = vpack.c.b16 %v1404, %v1400
    %v1937 = vpack.c.b16 %v1405, %v1401
    %v1938 = vpack.c.b16 %v1406, %v1402
    %v1939 = vpack.c.b16 %v1411, %v1407
    %v1940 = vpack.c.b16 %v1412, %v1408
    %v1941 = vpack.c.b16 %v1413, %v1409
    %v1942 = vpack.c.b16 %v1414, %v1410
    %v1943 = vpack.c.b16 %v1419, %v1415
    %v1944 = vpack.c.b16 %v1420, %v1416
    %v1945 = vpack.c.b16 %v1421, %v1417
    %v1946 = vpack.c.b16 %v1422, %v1418
    %v1947 = vpack.c.b16 %v1427, %v1423
    %v1948 = vpack.c.b16 %v1428, %v1424
    %v1949 = vpack.c.b16 %v1429, %v1425
    %v1950 = vpack.c.b16 %v1430, %v1426
    %v1951 = vpack.c.b16 %v1435, %v1431
    %v1952 = vpack.c.b16 %v1436, %v1432
    %v1953 = vpack.c.b16 %v1437, %v1433
    %v1954 = vpack.c.b16 %v1438, %v1434
    %v1955 = vpack.c.b16 %v1443, %v1439
    %v1956 = vpack.c.b16 %v1444, %v1440
    %v1957 = vpack.c.b16 %v1445, %v1441
    %v1958 = vpack.c.b16 %v1446, %v1442
    %v1959 = vpack.c.b16 %v1451, %v1447
    %v1960 = vpack.c.b16 %v1452, %v1448
    %v1961 = vpack.c.b16 %v1453, %v1449
    %v1962 = vpack.c.b16 %v1454, %v1450
    %v1963 = vpack.c.b16 %v1459, %v1455
    %v1964 = vpack.c.b16 %v1460, %v1456
    %v1965 = vpack.c.b16 %v1461, %v1457
    %v1966 = vpack.c.b16 %v1462, %v1458
    %v1967 = vpack.c.b16 %v1467, %v1463
    %v1968 = vpack.c.b16 %v1468, %v1464
    %v1969 = vpack.c.b16 %v1469, %v1465
    %v1970 = vpack.c.b16 %v1470, %v1466
    %v1971 = vpack.c.b16 %v1475, %v1471
    %v1972 = vpack.c.b16 %v1476, %v1472
    %v1973 = vpack.c.b16 %v1477, %v1473
    %v1974 = vpack.c.b16 %v1478, %v1474
    %v1975 = vpack.c.b16 %v1483, %v1479
    %v1976 = vpack.c.b16 %v1484, %v1480
    %v1977 = vpack.c.b16 %v1485, %v1481
    %v1978 = vpack.c.b16 %v1486, %v1482
    %v1979 = vpack.c.b16 %v1491, %v1487
    %v1980 = vpack.c.b16 %v1492, %v1488
    %v1981 = vpack.c.b16 %v1493, %v1489
    %v1982 = vpack.c.b16 %v1494, %v1490
    %v1983 = vpack.c.b16 %v1499, %v1495
    %v1984 = vpack.c.b16 %v1500, %v1496
    %v1985 = vpack.c.b16 %v1501, %v1497
    %v1986 = vpack.c.b16 %v1502, %v1498
    %v1987 = vpack.c.b16 %v1507, %v1503
    %v1988 = vpack.c.b16 %v1508, %v1504
    %v1989 = vpack.c.b16 %v1509, %v1505
    %v1990 = vpack.c.b16 %v1510, %v1506
    %v1991 = vpack.c.b16 %v1515, %v1511
    %v1992 = vpack.c.b16 %v1516, %v1512
    %v1993 = vpack.c.b16 %v1517, %v1513
    %v1994 = vpack.c.b16 %v1518, %v1514
    %v1995 = vpack.c.b16 %v1523, %v1519
    %v1996 = vpack.c.b16 %v1524, %v1520
    %v1997 = vpack.c.b16 %v1525, %v1521
    %v1998 = vpack.c.b16 %v1526, %v1522
    %v1999 = vpack.c.b16 %v1531, %v1527
    %v2000 = vpack.c.b16 %v1532, %v1528
    %v2001 = vpack.c.b16 %v1533, %v1529
    %v2002 = vpack.c.b16 %v1534, %v1530
    %v2003 = vpack.c.b16 %v1539, %v1535
    %v2004 = vpack.c.b16 %v1540, %v1536
    %v2005 = vpack.c.b16 %v1541, %v1537
    %v2006 = vpack.c.b16 %v1542, %v1538
    %v2007 = vpack.c.b16 %v1547, %v1543
    %v2008 = vpack.c.b16 %v1548, %v1544
    %v2009 = vpack.c.b16 %v1549, %v1545
    %v2010 = vpack.c.b16 %v1550, %v1546
    %v2011 = vpack.c.b16 %v1555, %v1551
    %v2012 = vpack.c.b16 %v1556, %v1552
    %v2013 = vpack.c.b16 %v1557, %v1553
    %v2014 = vpack.c.b16 %v1558, %v1554
    %v2015 = vpack.c.b16 %v1563, %v1559
    %v2016 = vpack.c.b16 %v1564, %v1560
    %v2017 = vpack.c.b16 %v1565, %v1561
    %v2018 = vpack.c.b16 %v1566, %v1562
    %v2019 = vpack.c.b16 %v1571, %v1567
    %v2020 = vpack.c.b16 %v1572, %v1568
    %v2021 = vpack.c.b16 %v1573, %v1569
    %v2022 = vpack.c.b16 %v1574, %v1570
    %v2023 = vpack.c.b16 %v1579, %v1575
    %v2024 = vpack.c.b16 %v1580, %v1576
    %v2025 = vpack.c.b16 %v1581, %v1577
    %v2026 = vpack.c.b16 %v1582, %v1578
    %v2027 = vpack.c.b16 %v1587, %v1583
    %v2028 = vpack.c.b16 %v1588, %v1584
    %v2029 = vpack.c.b16 %v1589, %v1585
    %v2030 = vpack.c.b16 %v1590, %v1586
    %v2031 = vpack.c.b16 %v1595, %v1591
    %v2032 = vpack.c.b16 %v1596, %v1592
    %v2033 = vpack.c.b16 %v1597, %v1593
    %v2034 = vpack.c.b16 %v1598, %v1594
    %v2035 = vpack.c.b16 %v1603, %v1599
    %v2036 = vpack.c.b16 %v1604, %v1600
    %v2037 = vpack.c.b16 %v1605, %v1601
    %v2038 = vpack.c.b16 %v1606, %v1602
    %v2039 = vpack.c.b16 %v1611, %v1607
    %v2040 = vpack.c.b16 %v1612, %v1608
    %v2041 = vpack.c.b16 %v1613, %v1609
    %v2042 = vpack.c.b16 %v1614, %v1610
    %v2043 = vpack.c.b16 %v1619, %v1615
    %v2044 = vpack.c.b16 %v1620, %v1616
    %v2045 = vpack.c.b16 %v1621, %v1617
    %v2046 = vpack.c.b16 %v1622, %v1618
    %v2047 = vpack.c.b16 %v1627, %v1623
    %v2048 = vpack.c.b16 %v1628, %v1624
    %v2049 = vpack.c.b16 %v1629, %v1625
    %v2050 = vpack.c.b16 %v1630, %v1626
    %v2051 = vpack.c.b16 %v1635, %v1631
    %v2052 = vpack.c.b16 %v1636, %v1632
    %v2053 = vpack.c.b16 %v1637, %v1633
    %v2054 = vpack.c.b16 %v1638, %v1634
    %v2055 = vpack.c.b16 %v1643, %v1639
    %v2056 = vpack.c.b16 %v1644, %v1640
    %v2057 = vpack.c.b16 %v1645, %v1641
    %v2058 = vpack.c.b16 %v1646, %v1642
    %v2059 = vpack.c.b16 %v1651, %v1647
    %v2060 = vpack.c.b16 %v1652, %v1648
    %v2061 = vpack.c.b16 %v1653, %v1649
    %v2062 = vpack.c.b16 %v1654, %v1650
    %v2063 = vpack.c.b16 %v1659, %v1655
    %v2064 = vpack.c.b16 %v1660, %v1656
    %v2065 = vpack.c.b16 %v1661, %v1657
    %v2066 = vpack.c.b16 %v1662, %v1658
    %v2067 = vpack.c.b16 %v1667, %v1663
    %v2068 = vpack.c.b16 %v1668, %v1664
    %v2069 = vpack.c.b16 %v1669, %v1665
    %v2070 = vpack.c.b16 %v1670, %v1666
    %v2071 = vpack.c.b16 %v1675, %v1671
    %v2072 = vpack.c.b16 %v1676, %v1672
    %v2073 = vpack.c.b16 %v1677, %v1673
    %v2074 = vpack.c.b16 %v1678, %v1674
    %v2075 = vpack.c.b16 %v1683, %v1679
    %v2076 = vpack.c.b16 %v1684, %v1680
    %v2077 = vpack.c.b16 %v1685, %v1681
    %v2078 = vpack.c.b16 %v1686, %v1682
    %v2079 = vpack.c.b16 %v1691, %v1687
    %v2080 = vpack.c.b16 %v1692, %v1688
    %v2081 = vpack.c.b16 %v1693, %v1689
    %v2082 = vpack.c.b16 %v1694, %v1690
    %v2083 = vpack.c.b16 %v1699, %v1695
    %v2084 = vpack.c.b16 %v1700, %v1696
    %v2085 = vpack.c.b16 %v1701, %v1697
    %v2086 = vpack.c.b16 %v1702, %v1698
    %2471 = vmatprep.subr.bf16.mxu0 %v1732
    %2472 = vmatpush1.bf16.msra.mxu0 %v1731
    %2473 = vmatprep.subr.bf16.mxu0 %v1728
    %2474 = vmatpush1.bf16.msra.mxu0 %v1727
    %2475 = vmatprep.subr.bf16.mxu0 %v1724
    %2476 = vmatpush1.bf16.msra.mxu0 %v1723
    %2477 = vmatprep.subr.bf16.mxu0 %v1720
    %2478 = vmatpush1.bf16.msra.mxu0 %v1719
    %2479 = vmatprep.subr.bf16.mxu0 %v1716
    %2480 = vmatpush1.bf16.msra.mxu0 %v1715
    %2481 = vmatprep.subr.bf16.mxu0 %v1712
    %2482 = vmatpush1.bf16.msra.mxu0 %v1711
    %2483 = vmatprep.subr.bf16.mxu0 %v1708
    %2484 = vmatpush1.bf16.msra.mxu0 %v1707
    %2485 = vmatprep.subr.bf16.mxu0 %v1704
    %2486 = vmatpush1.bf16.msra.mxu0 %v1703
    %2487 = vmatprep.subr.bf16.mxu0 %v1764
    %2488 = vmatpush2.bf16.msra.mxu0 %v1763
    %2489 = vmatprep.subr.bf16.mxu0 %v1760
    %2490 = vmatpush2.bf16.msra.mxu0 %v1759
    %2491 = vmatprep.subr.bf16.mxu0 %v1756
    %2492 = vmatpush2.bf16.msra.mxu0 %v1755
    %2493 = vmatprep.subr.bf16.mxu0 %v1752
    %2494 = vmatpush2.bf16.msra.mxu0 %v1751
    %2495 = vmatprep.subr.bf16.mxu0 %v1748
    %2496 = vmatpush2.bf16.msra.mxu0 %v1747
    %2497 = vmatprep.subr.bf16.mxu0 %v1744
    %2498 = vmatpush2.bf16.msra.mxu0 %v1743
    %2499 = vmatprep.subr.bf16.mxu0 %v1740
    %2500 = vmatpush2.bf16.msra.mxu0 %v1739
    %2501 = vmatprep.subr.bf16.mxu0 %v1736
    %2502 = vmatpush2.bf16.msra.mxu0 %v1735
    %2503 = vmatprep.mubr.bf16.mxu0 %v528
    %2504 = vmatmul.mubr.bf16.gmra.mxu0 %v527
    %v2505 = vpop.f32.mrf.mxu0
    %v2506 = vadd.f32 %v474, %v2505
    %v2507 = vpop.f32.mrf.mxu0
    %v2508 = vadd.f32 %v478, %v2507
    %v2509 = vpop.f32.mrf.mxu0
    %v2510 = vadd.f32 %v474, %v2509
    %v2511 = vpop.f32.mrf.mxu0
    %v2512 = vadd.f32 %v478, %v2511
    %2513 = vdwg.mxu0
    %2514 = vmatprep.subr.bf16.mxu0 %v1796
    %2515 = vmatpush1.bf16.msra.mxu0 %v1795
    %2516 = vmatprep.subr.bf16.mxu0 %v1792
    %2517 = vmatpush1.bf16.msra.mxu0 %v1791
    %2518 = vmatprep.subr.bf16.mxu0 %v1788
    %2519 = vmatpush1.bf16.msra.mxu0 %v1787
    %2520 = vmatprep.subr.bf16.mxu0 %v1784
    %2521 = vmatpush1.bf16.msra.mxu0 %v1783
    %2522 = vmatprep.subr.bf16.mxu0 %v1780
    %2523 = vmatpush1.bf16.msra.mxu0 %v1779
    %2524 = vmatprep.subr.bf16.mxu0 %v1776
    %2525 = vmatpush1.bf16.msra.mxu0 %v1775
    %2526 = vmatprep.subr.bf16.mxu0 %v1772
    %2527 = vmatpush1.bf16.msra.mxu0 %v1771
    %2528 = vmatprep.subr.bf16.mxu0 %v1768
    %2529 = vmatpush1.bf16.msra.mxu0 %v1767
    %2530 = vmatprep.subr.bf16.mxu0 %v1828
    %2531 = vmatpush2.bf16.msra.mxu0 %v1827
    %2532 = vmatprep.subr.bf16.mxu0 %v1824
    %2533 = vmatpush2.bf16.msra.mxu0 %v1823
    %2534 = vmatprep.subr.bf16.mxu0 %v1820
    %2535 = vmatpush2.bf16.msra.mxu0 %v1819
    %2536 = vmatprep.subr.bf16.mxu0 %v1816
    %2537 = vmatpush2.bf16.msra.mxu0 %v1815
    %2538 = vmatprep.subr.bf16.mxu0 %v1812
    %2539 = vmatpush2.bf16.msra.mxu0 %v1811
    %2540 = vmatprep.subr.bf16.mxu0 %v1808
    %2541 = vmatpush2.bf16.msra.mxu0 %v1807
    %2542 = vmatprep.subr.bf16.mxu0 %v1804
    %2543 = vmatpush2.bf16.msra.mxu0 %v1803
    %2544 = vmatprep.subr.bf16.mxu0 %v1800
    %2545 = vmatpush2.bf16.msra.mxu0 %v1799
    %2546 = vmatprep.mubr.bf16.mxu0 %v530
    %2547 = vmatmul.mubr.bf16.gmra.mxu0 %v529
    %v2548 = vpop.f32.mrf.mxu0
    %v2549 = vadd.f32 %v2506, %v2548
    %v2550 = vpop.f32.mrf.mxu0
    %v2551 = vadd.f32 %v2508, %v2550
    %v2552 = vpop.f32.mrf.mxu0
    %v2553 = vadd.f32 %v2510, %v2552
    %v2554 = vpop.f32.mrf.mxu0
    %v2555 = vadd.f32 %v2512, %v2554
    %2556 = vdwg.mxu0
    %2557 = vmatprep.subr.bf16.mxu0 %v1860
    %2558 = vmatpush1.bf16.msra.mxu0 %v1859
    %2559 = vmatprep.subr.bf16.mxu0 %v1856
    %2560 = vmatpush1.bf16.msra.mxu0 %v1855
    %2561 = vmatprep.subr.bf16.mxu0 %v1852
    %2562 = vmatpush1.bf16.msra.mxu0 %v1851
    %2563 = vmatprep.subr.bf16.mxu0 %v1848
    %2564 = vmatpush1.bf16.msra.mxu0 %v1847
    %2565 = vmatprep.subr.bf16.mxu0 %v1844
    %2566 = vmatpush1.bf16.msra.mxu0 %v1843
    %2567 = vmatprep.subr.bf16.mxu0 %v1840
    %2568 = vmatpush1.bf16.msra.mxu0 %v1839
    %2569 = vmatprep.subr.bf16.mxu0 %v1836
    %2570 = vmatpush1.bf16.msra.mxu0 %v1835
    %2571 = vmatprep.subr.bf16.mxu0 %v1832
    %2572 = vmatpush1.bf16.msra.mxu0 %v1831
    %2573 = vmatprep.subr.bf16.mxu0 %v1892
    %2574 = vmatpush2.bf16.msra.mxu0 %v1891
    %2575 = vmatprep.subr.bf16.mxu0 %v1888
    %2576 = vmatpush2.bf16.msra.mxu0 %v1887
    %2577 = vmatprep.subr.bf16.mxu0 %v1884
    %2578 = vmatpush2.bf16.msra.mxu0 %v1883
    %2579 = vmatprep.subr.bf16.mxu0 %v1880
    %2580 = vmatpush2.bf16.msra.mxu0 %v1879
    %2581 = vmatprep.subr.bf16.mxu0 %v1876
    %2582 = vmatpush2.bf16.msra.mxu0 %v1875
    %2583 = vmatprep.subr.bf16.mxu0 %v1872
    %2584 = vmatpush2.bf16.msra.mxu0 %v1871
    %2585 = vmatprep.subr.bf16.mxu0 %v1868
    %2586 = vmatpush2.bf16.msra.mxu0 %v1867
    %2587 = vmatprep.subr.bf16.mxu0 %v1864
    %2588 = vmatpush2.bf16.msra.mxu0 %v1863
    %2589 = vmatprep.mubr.bf16.mxu0 %v532
    %2590 = vmatmul.mubr.bf16.gmra.mxu0 %v531
    %v2591 = vpop.f32.mrf.mxu0
    %v2592 = vadd.f32 %v2549, %v2591
    %v2593 = vpop.f32.mrf.mxu0
    %v2594 = vadd.f32 %v2551, %v2593
    %v2595 = vpop.f32.mrf.mxu0
    %v2596 = vadd.f32 %v2553, %v2595
    %v2597 = vpop.f32.mrf.mxu0
    %v2598 = vadd.f32 %v2555, %v2597
    %2599 = vdwg.mxu0
    %2600 = vmatprep.subr.bf16.mxu0 %v1924
    %2601 = vmatpush1.bf16.msra.mxu0 %v1923
    %2602 = vmatprep.subr.bf16.mxu0 %v1920
    %2603 = vmatpush1.bf16.msra.mxu0 %v1919
    %2604 = vmatprep.subr.bf16.mxu0 %v1916
    %2605 = vmatpush1.bf16.msra.mxu0 %v1915
    %2606 = vmatprep.subr.bf16.mxu0 %v1912
    %2607 = vmatpush1.bf16.msra.mxu0 %v1911
    %2608 = vmatprep.subr.bf16.mxu0 %v1908
    %2609 = vmatpush1.bf16.msra.mxu0 %v1907
    %2610 = vmatprep.subr.bf16.mxu0 %v1904
    %2611 = vmatpush1.bf16.msra.mxu0 %v1903
    %2612 = vmatprep.subr.bf16.mxu0 %v1900
    %2613 = vmatpush1.bf16.msra.mxu0 %v1899
    %2614 = vmatprep.subr.bf16.mxu0 %v1896
    %2615 = vmatpush1.bf16.msra.mxu0 %v1895
    %2616 = vmatprep.subr.bf16.mxu0 %v1956
    %2617 = vmatpush2.bf16.msra.mxu0 %v1955
    %2618 = vmatprep.subr.bf16.mxu0 %v1952
    %2619 = vmatpush2.bf16.msra.mxu0 %v1951
    %2620 = vmatprep.subr.bf16.mxu0 %v1948
    %2621 = vmatpush2.bf16.msra.mxu0 %v1947
    %2622 = vmatprep.subr.bf16.mxu0 %v1944
    %2623 = vmatpush2.bf16.msra.mxu0 %v1943
    %2624 = vmatprep.subr.bf16.mxu0 %v1940
    %2625 = vmatpush2.bf16.msra.mxu0 %v1939
    %2626 = vmatprep.subr.bf16.mxu0 %v1936
    %2627 = vmatpush2.bf16.msra.mxu0 %v1935
    %2628 = vmatprep.subr.bf16.mxu0 %v1932
    %2629 = vmatpush2.bf16.msra.mxu0 %v1931
    %2630 = vmatprep.subr.bf16.mxu0 %v1928
    %2631 = vmatpush2.bf16.msra.mxu0 %v1927
    %2632 = vmatprep.mubr.bf16.mxu0 %v534
    %2633 = vmatmul.mubr.bf16.gmra.mxu0 %v533
    %v2634 = vpop.f32.mrf.mxu0
    %v2635 = vadd.f32 %v2592, %v2634
    %v2636 = vpop.f32.mrf.mxu0
    %v2637 = vadd.f32 %v2594, %v2636
    %v2638 = vpop.f32.mrf.mxu0
    %v2639 = vadd.f32 %v2596, %v2638
    %v2640 = vpop.f32.mrf.mxu0
    %v2641 = vadd.f32 %v2598, %v2640
    %2642 = vdwg.mxu0
    %2643 = vmatprep.subr.bf16.mxu0 %v1988
    %2644 = vmatpush1.bf16.msra.mxu0 %v1987
    %2645 = vmatprep.subr.bf16.mxu0 %v1984
    %2646 = vmatpush1.bf16.msra.mxu0 %v1983
    %2647 = vmatprep.subr.bf16.mxu0 %v1980
    %2648 = vmatpush1.bf16.msra.mxu0 %v1979
    %2649 = vmatprep.subr.bf16.mxu0 %v1976
    %2650 = vmatpush1.bf16.msra.mxu0 %v1975
    %2651 = vmatprep.subr.bf16.mxu0 %v1972
    %2652 = vmatpush1.bf16.msra.mxu0 %v1971
    %2653 = vmatprep.subr.bf16.mxu0 %v1968
    %2654 = vmatpush1.bf16.msra.mxu0 %v1967
    %2655 = vmatprep.subr.bf16.mxu0 %v1964
    %2656 = vmatpush1.bf16.msra.mxu0 %v1963
    %2657 = vmatprep.subr.bf16.mxu0 %v1960
    %2658 = vmatpush1.bf16.msra.mxu0 %v1959
    %2659 = vmatprep.subr.bf16.mxu0 %v2020
    %2660 = vmatpush2.bf16.msra.mxu0 %v2019
    %2661 = vmatprep.subr.bf16.mxu0 %v2016
    %2662 = vmatpush2.bf16.msra.mxu0 %v2015
    %2663 = vmatprep.subr.bf16.mxu0 %v2012
    %2664 = vmatpush2.bf16.msra.mxu0 %v2011
    %2665 = vmatprep.subr.bf16.mxu0 %v2008
    %2666 = vmatpush2.bf16.msra.mxu0 %v2007
    %2667 = vmatprep.subr.bf16.mxu0 %v2004
    %2668 = vmatpush2.bf16.msra.mxu0 %v2003
    %2669 = vmatprep.subr.bf16.mxu0 %v2000
    %2670 = vmatpush2.bf16.msra.mxu0 %v1999
    %2671 = vmatprep.subr.bf16.mxu0 %v1996
    %2672 = vmatpush2.bf16.msra.mxu0 %v1995
    %2673 = vmatprep.subr.bf16.mxu0 %v1992
    %2674 = vmatpush2.bf16.msra.mxu0 %v1991
    %2675 = vmatprep.mubr.bf16.mxu0 %v536
    %2676 = vmatmul.mubr.bf16.gmra.mxu0 %v535
    %v2677 = vpop.f32.mrf.mxu0
    %v2678 = vadd.f32 %v2635, %v2677
    %v2679 = vpop.f32.mrf.mxu0
    %v2680 = vadd.f32 %v2637, %v2679
    %v2681 = vpop.f32.mrf.mxu0
    %v2682 = vadd.f32 %v2639, %v2681
    %v2683 = vpop.f32.mrf.mxu0
    %v2684 = vadd.f32 %v2641, %v2683
    %2685 = vdwg.mxu0
    %2686 = vmatprep.subr.bf16.mxu0 %v2052
    %2687 = vmatpush1.bf16.msra.mxu0 %v2051
    %2688 = vmatprep.subr.bf16.mxu0 %v2048
    %2689 = vmatpush1.bf16.msra.mxu0 %v2047
    %2690 = vmatprep.subr.bf16.mxu0 %v2044
    %2691 = vmatpush1.bf16.msra.mxu0 %v2043
    %2692 = vmatprep.subr.bf16.mxu0 %v2040
    %2693 = vmatpush1.bf16.msra.mxu0 %v2039
    %2694 = vmatprep.subr.bf16.mxu0 %v2036
    %2695 = vmatpush1.bf16.msra.mxu0 %v2035
    %2696 = vmatprep.subr.bf16.mxu0 %v2032
    %2697 = vmatpush1.bf16.msra.mxu0 %v2031
    %2698 = vmatprep.subr.bf16.mxu0 %v2028
    %2699 = vmatpush1.bf16.msra.mxu0 %v2027
    %2700 = vmatprep.subr.bf16.mxu0 %v2024
    %2701 = vmatpush1.bf16.msra.mxu0 %v2023
    %2702 = vmatprep.subr.bf16.mxu0 %v2084
    %2703 = vmatpush2.bf16.msra.mxu0 %v2083
    %2704 = vmatprep.subr.bf16.mxu0 %v2080
    %2705 = vmatpush2.bf16.msra.mxu0 %v2079
    %2706 = vmatprep.subr.bf16.mxu0 %v2076
    %2707 = vmatpush2.bf16.msra.mxu0 %v2075
    %2708 = vmatprep.subr.bf16.mxu0 %v2072
    %2709 = vmatpush2.bf16.msra.mxu0 %v2071
    %2710 = vmatprep.subr.bf16.mxu0 %v2068
    %2711 = vmatpush2.bf16.msra.mxu0 %v2067
    %2712 = vmatprep.subr.bf16.mxu0 %v2064
    %2713 = vmatpush2.bf16.msra.mxu0 %v2063
    %2714 = vmatprep.subr.bf16.mxu0 %v2060
    %2715 = vmatpush2.bf16.msra.mxu0 %v2059
    %2716 = vmatprep.subr.bf16.mxu0 %v2056
    %2717 = vmatpush2.bf16.msra.mxu0 %v2055
    %2718 = vmatprep.mubr.bf16.mxu0 %v538
    %2719 = vmatmul.mubr.bf16.gmra.mxu0 %v537
    %v2720 = vpop.f32.mrf.mxu0
    %v2721 = vadd.f32 %v2678, %v2720
    %v2722 = vpop.f32.mrf.mxu0
    %v2723 = vadd.f32 %v2680, %v2722
    %v2724 = vpop.f32.mrf.mxu0
    %v2725 = vadd.f32 %v2682, %v2724
    %v2726 = vpop.f32.mrf.mxu0
    %v2727 = vadd.f32 %v2684, %v2726
    %2728 = vdwg.mxu0
    %2729 = vmatprep.subr.bf16.mxu0 %v1734
    %2730 = vmatpush1.bf16.msra.mxu0 %v1733
    %2731 = vmatprep.subr.bf16.mxu0 %v1730
    %2732 = vmatpush1.bf16.msra.mxu0 %v1729
    %2733 = vmatprep.subr.bf16.mxu0 %v1726
    %2734 = vmatpush1.bf16.msra.mxu0 %v1725
    %2735 = vmatprep.subr.bf16.mxu0 %v1722
    %2736 = vmatpush1.bf16.msra.mxu0 %v1721
    %2737 = vmatprep.subr.bf16.mxu0 %v1718
    %2738 = vmatpush1.bf16.msra.mxu0 %v1717
    %2739 = vmatprep.subr.bf16.mxu0 %v1714
    %2740 = vmatpush1.bf16.msra.mxu0 %v1713
    %2741 = vmatprep.subr.bf16.mxu0 %v1710
    %2742 = vmatpush1.bf16.msra.mxu0 %v1709
    %2743 = vmatprep.subr.bf16.mxu0 %v1706
    %2744 = vmatpush1.bf16.msra.mxu0 %v1705
    %2745 = vmatprep.subr.bf16.mxu0 %v1766
    %2746 = vmatpush2.bf16.msra.mxu0 %v1765
    %2747 = vmatprep.subr.bf16.mxu0 %v1762
    %2748 = vmatpush2.bf16.msra.mxu0 %v1761
    %2749 = vmatprep.subr.bf16.mxu0 %v1758
    %2750 = vmatpush2.bf16.msra.mxu0 %v1757
    %2751 = vmatprep.subr.bf16.mxu0 %v1754
    %2752 = vmatpush2.bf16.msra.mxu0 %v1753
    %2753 = vmatprep.subr.bf16.mxu0 %v1750
    %2754 = vmatpush2.bf16.msra.mxu0 %v1749
    %2755 = vmatprep.subr.bf16.mxu0 %v1746
    %2756 = vmatpush2.bf16.msra.mxu0 %v1745
    %2757 = vmatprep.subr.bf16.mxu0 %v1742
    %2758 = vmatpush2.bf16.msra.mxu0 %v1741
    %2759 = vmatprep.subr.bf16.mxu0 %v1738
    %2760 = vmatpush2.bf16.msra.mxu0 %v1737
    %2761 = vmatprep.mubr.bf16.mxu0 %v528
    %2762 = vmatmul.mubr.bf16.gmra.mxu0 %v527
    %v2763 = vpop.f32.mrf.mxu0
    %v2764 = vadd.f32 %v482, %v2763
    %v2765 = vpop.f32.mrf.mxu0
    %v2766 = vadd.f32 %v486, %v2765
    %v2767 = vpop.f32.mrf.mxu0
    %v2768 = vadd.f32 %v482, %v2767
    %v2769 = vpop.f32.mrf.mxu0
    %v2770 = vadd.f32 %v486, %v2769
    %2771 = vdwg.mxu0
    %2772 = vmatprep.subr.bf16.mxu0 %v1798
    %2773 = vmatpush1.bf16.msra.mxu0 %v1797
    %2774 = vmatprep.subr.bf16.mxu0 %v1794
    %2775 = vmatpush1.bf16.msra.mxu0 %v1793
    %2776 = vmatprep.subr.bf16.mxu0 %v1790
    %2777 = vmatpush1.bf16.msra.mxu0 %v1789
    %2778 = vmatprep.subr.bf16.mxu0 %v1786
    %2779 = vmatpush1.bf16.msra.mxu0 %v1785
    %2780 = vmatprep.subr.bf16.mxu0 %v1782
    %2781 = vmatpush1.bf16.msra.mxu0 %v1781
    %2782 = vmatprep.subr.bf16.mxu0 %v1778
    %2783 = vmatpush1.bf16.msra.mxu0 %v1777
    %2784 = vmatprep.subr.bf16.mxu0 %v1774
    %2785 = vmatpush1.bf16.msra.mxu0 %v1773
    %2786 = vmatprep.subr.bf16.mxu0 %v1770
    %2787 = vmatpush1.bf16.msra.mxu0 %v1769
    %2788 = vmatprep.subr.bf16.mxu0 %v1830
    %2789 = vmatpush2.bf16.msra.mxu0 %v1829
    %2790 = vmatprep.subr.bf16.mxu0 %v1826
    %2791 = vmatpush2.bf16.msra.mxu0 %v1825
    %2792 = vmatprep.subr.bf16.mxu0 %v1822
    %2793 = vmatpush2.bf16.msra.mxu0 %v1821
    %2794 = vmatprep.subr.bf16.mxu0 %v1818
    %2795 = vmatpush2.bf16.msra.mxu0 %v1817
    %2796 = vmatprep.subr.bf16.mxu0 %v1814
    %2797 = vmatpush2.bf16.msra.mxu0 %v1813
    %2798 = vmatprep.subr.bf16.mxu0 %v1810
    %2799 = vmatpush2.bf16.msra.mxu0 %v1809
    %2800 = vmatprep.subr.bf16.mxu0 %v1806
    %2801 = vmatpush2.bf16.msra.mxu0 %v1805
    %2802 = vmatprep.subr.bf16.mxu0 %v1802
    %2803 = vmatpush2.bf16.msra.mxu0 %v1801
    %2804 = vmatprep.mubr.bf16.mxu0 %v530
    %2805 = vmatmul.mubr.bf16.gmra.mxu0 %v529
    %v2806 = vpop.f32.mrf.mxu0
    %v2807 = vadd.f32 %v2764, %v2806
    %v2808 = vpop.f32.mrf.mxu0
    %v2809 = vadd.f32 %v2766, %v2808
    %v2810 = vpop.f32.mrf.mxu0
    %v2811 = vadd.f32 %v2768, %v2810
    %v2812 = vpop.f32.mrf.mxu0
    %v2813 = vadd.f32 %v2770, %v2812
    %2814 = vdwg.mxu0
    %2815 = vmatprep.subr.bf16.mxu0 %v1862
    %2816 = vmatpush1.bf16.msra.mxu0 %v1861
    %2817 = vmatprep.subr.bf16.mxu0 %v1858
    %2818 = vmatpush1.bf16.msra.mxu0 %v1857
    %2819 = vmatprep.subr.bf16.mxu0 %v1854
    %2820 = vmatpush1.bf16.msra.mxu0 %v1853
    %2821 = vmatprep.subr.bf16.mxu0 %v1850
    %2822 = vmatpush1.bf16.msra.mxu0 %v1849
    %2823 = vmatprep.subr.bf16.mxu0 %v1846
    %2824 = vmatpush1.bf16.msra.mxu0 %v1845
    %2825 = vmatprep.subr.bf16.mxu0 %v1842
    %2826 = vmatpush1.bf16.msra.mxu0 %v1841
    %2827 = vmatprep.subr.bf16.mxu0 %v1838
    %2828 = vmatpush1.bf16.msra.mxu0 %v1837
    %2829 = vmatprep.subr.bf16.mxu0 %v1834
    %2830 = vmatpush1.bf16.msra.mxu0 %v1833
    %2831 = vmatprep.subr.bf16.mxu0 %v1894
    %2832 = vmatpush2.bf16.msra.mxu0 %v1893
    %2833 = vmatprep.subr.bf16.mxu0 %v1890
    %2834 = vmatpush2.bf16.msra.mxu0 %v1889
    %2835 = vmatprep.subr.bf16.mxu0 %v1886
    %2836 = vmatpush2.bf16.msra.mxu0 %v1885
    %2837 = vmatprep.subr.bf16.mxu0 %v1882
    %2838 = vmatpush2.bf16.msra.mxu0 %v1881
    %2839 = vmatprep.subr.bf16.mxu0 %v1878
    %2840 = vmatpush2.bf16.msra.mxu0 %v1877
    %2841 = vmatprep.subr.bf16.mxu0 %v1874
    %2842 = vmatpush2.bf16.msra.mxu0 %v1873
    %2843 = vmatprep.subr.bf16.mxu0 %v1870
    %2844 = vmatpush2.bf16.msra.mxu0 %v1869
    %2845 = vmatprep.subr.bf16.mxu0 %v1866
    %2846 = vmatpush2.bf16.msra.mxu0 %v1865
    %2847 = vmatprep.mubr.bf16.mxu0 %v532
    %2848 = vmatmul.mubr.bf16.gmra.mxu0 %v531
    %v2849 = vpop.f32.mrf.mxu0
    %v2850 = vadd.f32 %v2807, %v2849
    %v2851 = vpop.f32.mrf.mxu0
    %v2852 = vadd.f32 %v2809, %v2851
    %v2853 = vpop.f32.mrf.mxu0
    %v2854 = vadd.f32 %v2811, %v2853
    %v2855 = vpop.f32.mrf.mxu0
    %v2856 = vadd.f32 %v2813, %v2855
    %2857 = vdwg.mxu0
    %2858 = vmatprep.subr.bf16.mxu0 %v1926
    %2859 = vmatpush1.bf16.msra.mxu0 %v1925
    %2860 = vmatprep.subr.bf16.mxu0 %v1922
    %2861 = vmatpush1.bf16.msra.mxu0 %v1921
    %2862 = vmatprep.subr.bf16.mxu0 %v1918
    %2863 = vmatpush1.bf16.msra.mxu0 %v1917
    %2864 = vmatprep.subr.bf16.mxu0 %v1914
    %2865 = vmatpush1.bf16.msra.mxu0 %v1913
    %2866 = vmatprep.subr.bf16.mxu0 %v1910
    %2867 = vmatpush1.bf16.msra.mxu0 %v1909
    %2868 = vmatprep.subr.bf16.mxu0 %v1906
    %2869 = vmatpush1.bf16.msra.mxu0 %v1905
    %2870 = vmatprep.subr.bf16.mxu0 %v1902
    %2871 = vmatpush1.bf16.msra.mxu0 %v1901
    %2872 = vmatprep.subr.bf16.mxu0 %v1898
    %2873 = vmatpush1.bf16.msra.mxu0 %v1897
    %2874 = vmatprep.subr.bf16.mxu0 %v1958
    %2875 = vmatpush2.bf16.msra.mxu0 %v1957
    %2876 = vmatprep.subr.bf16.mxu0 %v1954
    %2877 = vmatpush2.bf16.msra.mxu0 %v1953
    %2878 = vmatprep.subr.bf16.mxu0 %v1950
    %2879 = vmatpush2.bf16.msra.mxu0 %v1949
    %2880 = vmatprep.subr.bf16.mxu0 %v1946
    %2881 = vmatpush2.bf16.msra.mxu0 %v1945
    %2882 = vmatprep.subr.bf16.mxu0 %v1942
    %2883 = vmatpush2.bf16.msra.mxu0 %v1941
    %2884 = vmatprep.subr.bf16.mxu0 %v1938
    %2885 = vmatpush2.bf16.msra.mxu0 %v1937
    %2886 = vmatprep.subr.bf16.mxu0 %v1934
    %2887 = vmatpush2.bf16.msra.mxu0 %v1933
    %2888 = vmatprep.subr.bf16.mxu0 %v1930
    %2889 = vmatpush2.bf16.msra.mxu0 %v1929
    %2890 = vmatprep.mubr.bf16.mxu0 %v534
    %2891 = vmatmul.mubr.bf16.gmra.mxu0 %v533
    %v2892 = vpop.f32.mrf.mxu0
    %v2893 = vadd.f32 %v2850, %v2892
    %v2894 = vpop.f32.mrf.mxu0
    %v2895 = vadd.f32 %v2852, %v2894
    %v2896 = vpop.f32.mrf.mxu0
    %v2897 = vadd.f32 %v2854, %v2896
    %v2898 = vpop.f32.mrf.mxu0
    %v2899 = vadd.f32 %v2856, %v2898
    %2900 = vdwg.mxu0
    %2901 = vmatprep.subr.bf16.mxu0 %v1990
    %2902 = vmatpush1.bf16.msra.mxu0 %v1989
    %2903 = vmatprep.subr.bf16.mxu0 %v1986
    %2904 = vmatpush1.bf16.msra.mxu0 %v1985
    %2905 = vmatprep.subr.bf16.mxu0 %v1982
    %2906 = vmatpush1.bf16.msra.mxu0 %v1981
    %2907 = vmatprep.subr.bf16.mxu0 %v1978
    %2908 = vmatpush1.bf16.msra.mxu0 %v1977
    %2909 = vmatprep.subr.bf16.mxu0 %v1974
    %2910 = vmatpush1.bf16.msra.mxu0 %v1973
    %2911 = vmatprep.subr.bf16.mxu0 %v1970
    %2912 = vmatpush1.bf16.msra.mxu0 %v1969
    %2913 = vmatprep.subr.bf16.mxu0 %v1966
    %2914 = vmatpush1.bf16.msra.mxu0 %v1965
    %2915 = vmatprep.subr.bf16.mxu0 %v1962
    %2916 = vmatpush1.bf16.msra.mxu0 %v1961
    %2917 = vmatprep.subr.bf16.mxu0 %v2022
    %2918 = vmatpush2.bf16.msra.mxu0 %v2021
    %2919 = vmatprep.subr.bf16.mxu0 %v2018
    %2920 = vmatpush2.bf16.msra.mxu0 %v2017
    %2921 = vmatprep.subr.bf16.mxu0 %v2014
    %2922 = vmatpush2.bf16.msra.mxu0 %v2013
    %2923 = vmatprep.subr.bf16.mxu0 %v2010
    %2924 = vmatpush2.bf16.msra.mxu0 %v2009
    %2925 = vmatprep.subr.bf16.mxu0 %v2006
    %2926 = vmatpush2.bf16.msra.mxu0 %v2005
    %2927 = vmatprep.subr.bf16.mxu0 %v2002
    %2928 = vmatpush2.bf16.msra.mxu0 %v2001
    %2929 = vmatprep.subr.bf16.mxu0 %v1998
    %2930 = vmatpush2.bf16.msra.mxu0 %v1997
    %2931 = vmatprep.subr.bf16.mxu0 %v1994
    %2932 = vmatpush2.bf16.msra.mxu0 %v1993
    %2933 = vmatprep.mubr.bf16.mxu0 %v536
    %2934 = vmatmul.mubr.bf16.gmra.mxu0 %v535
    %v2935 = vpop.f32.mrf.mxu0
    %v2936 = vadd.f32 %v2893, %v2935
    %v2937 = vpop.f32.mrf.mxu0
    %v2938 = vadd.f32 %v2895, %v2937
    %v2939 = vpop.f32.mrf.mxu0
    %v2940 = vadd.f32 %v2897, %v2939
    %v2941 = vpop.f32.mrf.mxu0
    %v2942 = vadd.f32 %v2899, %v2941
    %2943 = vdwg.mxu0
    %2944 = vmatprep.subr.bf16.mxu0 %v2054
    %2945 = vmatpush1.bf16.msra.mxu0 %v2053
    %2946 = vmatprep.subr.bf16.mxu0 %v2050
    %2947 = vmatpush1.bf16.msra.mxu0 %v2049
    %2948 = vmatprep.subr.bf16.mxu0 %v2046
    %2949 = vmatpush1.bf16.msra.mxu0 %v2045
    %2950 = vmatprep.subr.bf16.mxu0 %v2042
    %2951 = vmatpush1.bf16.msra.mxu0 %v2041
    %2952 = vmatprep.subr.bf16.mxu0 %v2038
    %2953 = vmatpush1.bf16.msra.mxu0 %v2037
    %2954 = vmatprep.subr.bf16.mxu0 %v2034
    %2955 = vmatpush1.bf16.msra.mxu0 %v2033
    %2956 = vmatprep.subr.bf16.mxu0 %v2030
    %2957 = vmatpush1.bf16.msra.mxu0 %v2029
    %2958 = vmatprep.subr.bf16.mxu0 %v2026
    %2959 = vmatpush1.bf16.msra.mxu0 %v2025
    %2960 = vmatprep.subr.bf16.mxu0 %v2086
    %2961 = vmatpush2.bf16.msra.mxu0 %v2085
    %2962 = vmatprep.subr.bf16.mxu0 %v2082
    %2963 = vmatpush2.bf16.msra.mxu0 %v2081
    %2964 = vmatprep.subr.bf16.mxu0 %v2078
    %2965 = vmatpush2.bf16.msra.mxu0 %v2077
    %2966 = vmatprep.subr.bf16.mxu0 %v2074
    %2967 = vmatpush2.bf16.msra.mxu0 %v2073
    %2968 = vmatprep.subr.bf16.mxu0 %v2070
    %2969 = vmatpush2.bf16.msra.mxu0 %v2069
    %2970 = vmatprep.subr.bf16.mxu0 %v2066
    %2971 = vmatpush2.bf16.msra.mxu0 %v2065
    %2972 = vmatprep.subr.bf16.mxu0 %v2062
    %2973 = vmatpush2.bf16.msra.mxu0 %v2061
    %2974 = vmatprep.subr.bf16.mxu0 %v2058
    %2975 = vmatpush2.bf16.msra.mxu0 %v2057
    %2976 = vmatprep.mubr.bf16.mxu0 %v538
    %2977 = vmatmul.mubr.bf16.gmra.mxu0 %v537
    %v2978 = vpop.f32.mrf.mxu0
    %v2979 = vadd.f32 %v2936, %v2978
    %v2980 = vpop.f32.mrf.mxu0
    %v2981 = vadd.f32 %v2938, %v2980
    %v2982 = vpop.f32.mrf.mxu0
    %v2983 = vadd.f32 %v2940, %v2982
    %v2984 = vpop.f32.mrf.mxu0
    %v2985 = vadd.f32 %v2942, %v2984
    %2986 = vdwg.mxu0
    %v2987 = vmax.f32 %v2721, 0.0
    %v2988 = vmax.f32 %v2723, 0.0
    %v2989 = vmax.f32 %v2979, 0.0
    %v2990 = vmax.f32 %v2981, 0.0
    %v2991 = vmax.f32 %v2725, 0.0
    %v2992 = vmax.f32 %v2727, 0.0
    %v2993 = vmax.f32 %v2983, 0.0
    %v2994 = vmax.f32 %v2985, 0.0
    %v2995 = vpack.c.bf16 %v2991, %v2987
    %v2996 = vpack.c.bf16 %v2992, %v2988
    %v2997 = vpack.c.bf16 %v2993, %v2989
    %v2998 = vpack.c.bf16 %v2994, %v2990
    %v2999 = vld [vmem:[#allocation7] sm:$0xf]
    %v3000 = vld [vmem:[#allocation7 + $0x4] sm:$0xf]
    %v3001 = vld [vmem:[#allocation7 + $0x8] sm:$0xf]
    %v3002 = vld [vmem:[#allocation7 + $0xc] sm:$0xf]
    %v3003 = vld [vmem:[#allocation7 + $0x10] sm:$0xf]
    %v3004 = vld [vmem:[#allocation7 + $0x14] sm:$0xf]
    %v3005 = vld [vmem:[#allocation7 + $0x18] sm:$0xf]
    %v3006 = vld [vmem:[#allocation7 + $0x1c] sm:$0xf]
    %v3007 = vld [vmem:[#allocation7 + $0x20] sm:$0xf]
    %v3008 = vld [vmem:[#allocation7 + $0x24] sm:$0xf]
    %v3009 = vld [vmem:[#allocation7 + $0x28] sm:$0xf]
    %v3010 = vld [vmem:[#allocation7 + $0x2c] sm:$0xf]
    %v3011 = vld [vmem:[#allocation7 + $0x30] sm:$0xf]
    %v3012 = vld [vmem:[#allocation7 + $0x34] sm:$0xf]
    %v3013 = vld [vmem:[#allocation7 + $0x38] sm:$0xf]
    %v3014 = vld [vmem:[#allocation7 + $0x3c] sm:$0xf]
    %v3015 = vld [vmem:[#allocation7 + $0x40] sm:$0xf]
    %v3016 = vld [vmem:[#allocation7 + $0x44] sm:$0xf]
    %v3017 = vld [vmem:[#allocation7 + $0x48] sm:$0xf]
    %v3018 = vld [vmem:[#allocation7 + $0x4c] sm:$0xf]
    %v3019 = vld [vmem:[#allocation7 + $0x50] sm:$0xf]
    %v3020 = vld [vmem:[#allocation7 + $0x54] sm:$0xf]
    %v3021 = vld [vmem:[#allocation7 + $0x58] sm:$0xf]
    %v3022 = vld [vmem:[#allocation7 + $0x5c] sm:$0xf]
    %v3023 = vld [vmem:[#allocation7 + $0x60] sm:$0xf]
    %v3024 = vld [vmem:[#allocation7 + $0x64] sm:$0xf]
    %v3025 = vld [vmem:[#allocation7 + $0x68] sm:$0xf]
    %v3026 = vld [vmem:[#allocation7 + $0x6c] sm:$0xf]
    %v3027 = vld [vmem:[#allocation7 + $0x70] sm:$0xf]
    %v3028 = vld [vmem:[#allocation7 + $0x74] sm:$0xf]
    %v3029 = vld [vmem:[#allocation7 + $0x78] sm:$0xf]
    %v3030 = vld [vmem:[#allocation7 + $0x7c] sm:$0xf]
    %v3031 = vld [vmem:[#allocation7 + $0x80] sm:$0xf]
    %v3032 = vld [vmem:[#allocation7 + $0x84] sm:$0xf]
    %v3033 = vld [vmem:[#allocation7 + $0x88] sm:$0xf]
    %v3034 = vld [vmem:[#allocation7 + $0x8c] sm:$0xf]
    %v3035 = vld [vmem:[#allocation7 + $0x90] sm:$0xf]
    %v3036 = vld [vmem:[#allocation7 + $0x94] sm:$0xf]
    %v3037 = vld [vmem:[#allocation7 + $0x98] sm:$0xf]
    %v3038 = vld [vmem:[#allocation7 + $0x9c] sm:$0xf]
    %v3039 = vld [vmem:[#allocation7 + $0xa0] sm:$0xf]
    %v3040 = vld [vmem:[#allocation7 + $0xa4] sm:$0xf]
    %v3041 = vld [vmem:[#allocation7 + $0xa8] sm:$0xf]
    %v3042 = vld [vmem:[#allocation7 + $0xac] sm:$0xf]
    %v3043 = vld [vmem:[#allocation7 + $0xb0] sm:$0xf]
    %v3044 = vld [vmem:[#allocation7 + $0xb4] sm:$0xf]
    %v3045 = vld [vmem:[#allocation7 + $0xb8] sm:$0xf]
    %v3046 = vld [vmem:[#allocation7 + $0xbc] sm:$0xf]
    %v3047 = vld [vmem:[#allocation7 + $0xc0] sm:$0xf]
    %v3048 = vld [vmem:[#allocation7 + $0xc4] sm:$0xf]
    %v3049 = vld [vmem:[#allocation7 + $0xc8] sm:$0xf]
    %v3050 = vld [vmem:[#allocation7 + $0xcc] sm:$0xf]
    %v3051 = vld [vmem:[#allocation7 + $0xd0] sm:$0xf]
    %v3052 = vld [vmem:[#allocation7 + $0xd4] sm:$0xf]
    %v3053 = vld [vmem:[#allocation7 + $0xd8] sm:$0xf]
    %v3054 = vld [vmem:[#allocation7 + $0xdc] sm:$0xf]
    %v3055 = vld [vmem:[#allocation7 + $0xe0] sm:$0xf]
    %v3056 = vld [vmem:[#allocation7 + $0xe4] sm:$0xf]
    %v3057 = vld [vmem:[#allocation7 + $0xe8] sm:$0xf]
    %v3058 = vld [vmem:[#allocation7 + $0xec] sm:$0xf]
    %v3059 = vld [vmem:[#allocation7 + $0xf0] sm:$0xf]
    %v3060 = vld [vmem:[#allocation7 + $0xf4] sm:$0xf]
    %v3061 = vld [vmem:[#allocation7 + $0xf8] sm:$0xf]
    %v3062 = vld [vmem:[#allocation7 + $0xfc] sm:$0xf]
    %v3063 = vld [vmem:[#allocation8] sm:$0x1]
    %v3065 = vlaneseq
    %v3066 = vshrl.u32 %v3065, 7
    %v3067 = vsub.s32 0, %v3066
    %v3068 = vrot.slane %v3063, %v3067
    %v3134 = vunpack.c.l.b16 %v2999
    %v3135 = vunpack.c.l.b16 %v3000
    %v3136 = vunpack.c.l.b16 %v3001
    %v3137 = vunpack.c.l.b16 %v3002
    %v3138 = vunpack.c.l.b16 %v3003
    %v3139 = vunpack.c.l.b16 %v3004
    %v3140 = vunpack.c.l.b16 %v3005
    %v3141 = vunpack.c.l.b16 %v3006
    %v3142 = vunpack.c.l.b16 %v3007
    %v3143 = vunpack.c.l.b16 %v3008
    %v3144 = vunpack.c.l.b16 %v3009
    %v3145 = vunpack.c.l.b16 %v3010
    %v3146 = vunpack.c.l.b16 %v3011
    %v3147 = vunpack.c.l.b16 %v3012
    %v3148 = vunpack.c.l.b16 %v3013
    %v3149 = vunpack.c.l.b16 %v3014
    %v3150 = vunpack.c.l.b16 %v3015
    %v3151 = vunpack.c.l.b16 %v3016
    %v3152 = vunpack.c.l.b16 %v3017
    %v3153 = vunpack.c.l.b16 %v3018
    %v3154 = vunpack.c.l.b16 %v3019
    %v3155 = vunpack.c.l.b16 %v3020
    %v3156 = vunpack.c.l.b16 %v3021
    %v3157 = vunpack.c.l.b16 %v3022
    %v3158 = vunpack.c.l.b16 %v3023
    %v3159 = vunpack.c.l.b16 %v3024
    %v3160 = vunpack.c.l.b16 %v3025
    %v3161 = vunpack.c.l.b16 %v3026
    %v3162 = vunpack.c.l.b16 %v3027
    %v3163 = vunpack.c.l.b16 %v3028
    %v3164 = vunpack.c.l.b16 %v3029
    %v3165 = vunpack.c.l.b16 %v3030
    %v3166 = vunpack.c.l.b16 %v3031
    %v3167 = vunpack.c.l.b16 %v3032
    %v3168 = vunpack.c.l.b16 %v3033
    %v3169 = vunpack.c.l.b16 %v3034
    %v3170 = vunpack.c.l.b16 %v3035
    %v3171 = vunpack.c.l.b16 %v3036
    %v3172 = vunpack.c.l.b16 %v3037
    %v3173 = vunpack.c.l.b16 %v3038
    %v3174 = vunpack.c.l.b16 %v3039
    %v3175 = vunpack.c.l.b16 %v3040
    %v3176 = vunpack.c.l.b16 %v3041
    %v3177 = vunpack.c.l.b16 %v3042
    %v3178 = vunpack.c.l.b16 %v3043
    %v3179 = vunpack.c.l.b16 %v3044
    %v3180 = vunpack.c.l.b16 %v3045
    %v3181 = vunpack.c.l.b16 %v3046
    %v3182 = vunpack.c.l.b16 %v3047
    %v3183 = vunpack.c.l.b16 %v3048
    %v3184 = vunpack.c.l.b16 %v3049
    %v3185 = vunpack.c.l.b16 %v3050
    %v3186 = vunpack.c.l.b16 %v3051
    %v3187 = vunpack.c.l.b16 %v3052
    %v3188 = vunpack.c.l.b16 %v3053
    %v3189 = vunpack.c.l.b16 %v3054
    %v3190 = vunpack.c.l.b16 %v3055
    %v3191 = vunpack.c.l.b16 %v3056
    %v3192 = vunpack.c.l.b16 %v3057
    %v3193 = vunpack.c.l.b16 %v3058
    %v3194 = vunpack.c.l.b16 %v3059
    %v3195 = vunpack.c.l.b16 %v3060
    %v3196 = vunpack.c.l.b16 %v3061
    %v3197 = vunpack.c.l.b16 %v3062
    %v3198 = vpack.c.b16 %v3135, %v3134
    %v3199 = vpack.c.b16 %v3137, %v3136
    %v3200 = vpack.c.b16 %v3139, %v3138
    %v3201 = vpack.c.b16 %v3141, %v3140
    %v3202 = vpack.c.b16 %v3143, %v3142
    %v3203 = vpack.c.b16 %v3145, %v3144
    %v3204 = vpack.c.b16 %v3147, %v3146
    %v3205 = vpack.c.b16 %v3149, %v3148
    %v3206 = vpack.c.b16 %v3151, %v3150
    %v3207 = vpack.c.b16 %v3153, %v3152
    %v3208 = vpack.c.b16 %v3155, %v3154
    %v3209 = vpack.c.b16 %v3157, %v3156
    %v3210 = vpack.c.b16 %v3159, %v3158
    %v3211 = vpack.c.b16 %v3161, %v3160
    %v3212 = vpack.c.b16 %v3163, %v3162
    %v3213 = vpack.c.b16 %v3165, %v3164
    %v3214 = vpack.c.b16 %v3167, %v3166
    %v3215 = vpack.c.b16 %v3169, %v3168
    %v3216 = vpack.c.b16 %v3171, %v3170
    %v3217 = vpack.c.b16 %v3173, %v3172
    %v3218 = vpack.c.b16 %v3175, %v3174
    %v3219 = vpack.c.b16 %v3177, %v3176
    %v3220 = vpack.c.b16 %v3179, %v3178
    %v3221 = vpack.c.b16 %v3181, %v3180
    %v3222 = vpack.c.b16 %v3183, %v3182
    %v3223 = vpack.c.b16 %v3185, %v3184
    %v3224 = vpack.c.b16 %v3187, %v3186
    %v3225 = vpack.c.b16 %v3189, %v3188
    %v3226 = vpack.c.b16 %v3191, %v3190
    %v3227 = vpack.c.b16 %v3193, %v3192
    %v3228 = vpack.c.b16 %v3195, %v3194
    %v3229 = vpack.c.b16 %v3197, %v3196
    %3262 = vmatprep.subr.bf16.mxu0 0
    %3263 = vmatpush1.bf16.msra.mxu0 %v3205
    %3264 = vmatprep.subr.bf16.mxu0 0
    %3265 = vmatpush1.bf16.msra.mxu0 %v3204
    %3266 = vmatprep.subr.bf16.mxu0 0
    %3267 = vmatpush1.bf16.msra.mxu0 %v3203
    %3268 = vmatprep.subr.bf16.mxu0 0
    %3269 = vmatpush1.bf16.msra.mxu0 %v3202
    %3270 = vmatprep.subr.bf16.mxu0 0
    %3271 = vmatpush1.bf16.msra.mxu0 %v3201
    %3272 = vmatprep.subr.bf16.mxu0 0
    %3273 = vmatpush1.bf16.msra.mxu0 %v3200
    %3274 = vmatprep.subr.bf16.mxu0 0
    %3275 = vmatpush1.bf16.msra.mxu0 %v3199
    %3276 = vmatprep.subr.bf16.mxu0 0
    %3277 = vmatpush1.bf16.msra.mxu0 %v3198
    %3278 = vmatprep.subr.bf16.mxu0 0
    %3279 = vmatpush2.bf16.msra.mxu0 %v3213
    %3280 = vmatprep.subr.bf16.mxu0 0
    %3281 = vmatpush2.bf16.msra.mxu0 %v3212
    %3282 = vmatprep.subr.bf16.mxu0 0
    %3283 = vmatpush2.bf16.msra.mxu0 %v3211
    %3284 = vmatprep.subr.bf16.mxu0 0
    %3285 = vmatpush2.bf16.msra.mxu0 %v3210
    %3286 = vmatprep.subr.bf16.mxu0 0
    %3287 = vmatpush2.bf16.msra.mxu0 %v3209
    %3288 = vmatprep.subr.bf16.mxu0 0
    %3289 = vmatpush2.bf16.msra.mxu0 %v3208
    %3290 = vmatprep.subr.bf16.mxu0 0
    %3291 = vmatpush2.bf16.msra.mxu0 %v3207
    %3292 = vmatprep.subr.bf16.mxu0 0
    %3293 = vmatpush2.bf16.msra.mxu0 %v3206
    %3294 = vmatprep.mubr.bf16.mxu0 %v2996
    %3295 = vmatmul.mubr.bf16.gmra.mxu0 %v2995
    %v3296 = vpop.f32.mrf.mxu0
    %v3297 = vadd.f32 %v3068, %v3296
    %v3298 = vpop.f32.mrf.mxu0
    %v3299 = vpop.f32.mrf.mxu0
    %v3300 = vadd.f32 %v3068, %v3299
    %v3301 = vpop.f32.mrf.mxu0
    %3302 = vdwg.mxu0
    %3303 = vmatprep.subr.bf16.mxu0 0
    %3304 = vmatpush1.bf16.msra.mxu0 %v3221
    %3305 = vmatprep.subr.bf16.mxu0 0
    %3306 = vmatpush1.bf16.msra.mxu0 %v3220
    %3307 = vmatprep.subr.bf16.mxu0 0
    %3308 = vmatpush1.bf16.msra.mxu0 %v3219
    %3309 = vmatprep.subr.bf16.mxu0 0
    %3310 = vmatpush1.bf16.msra.mxu0 %v3218
    %3311 = vmatprep.subr.bf16.mxu0 0
    %3312 = vmatpush1.bf16.msra.mxu0 %v3217
    %3313 = vmatprep.subr.bf16.mxu0 0
    %3314 = vmatpush1.bf16.msra.mxu0 %v3216
    %3315 = vmatprep.subr.bf16.mxu0 0
    %3316 = vmatpush1.bf16.msra.mxu0 %v3215
    %3317 = vmatprep.subr.bf16.mxu0 0
    %3318 = vmatpush1.bf16.msra.mxu0 %v3214
    %3319 = vmatprep.subr.bf16.mxu0 0
    %3320 = vmatpush2.bf16.msra.mxu0 %v3229
    %3321 = vmatprep.subr.bf16.mxu0 0
    %3322 = vmatpush2.bf16.msra.mxu0 %v3228
    %3323 = vmatprep.subr.bf16.mxu0 0
    %3324 = vmatpush2.bf16.msra.mxu0 %v3227
    %3325 = vmatprep.subr.bf16.mxu0 0
    %3326 = vmatpush2.bf16.msra.mxu0 %v3226
    %3327 = vmatprep.subr.bf16.mxu0 0
    %3328 = vmatpush2.bf16.msra.mxu0 %v3225
    %3329 = vmatprep.subr.bf16.mxu0 0
    %3330 = vmatpush2.bf16.msra.mxu0 %v3224
    %3331 = vmatprep.subr.bf16.mxu0 0
    %3332 = vmatpush2.bf16.msra.mxu0 %v3223
    %3333 = vmatprep.subr.bf16.mxu0 0
    %3334 = vmatpush2.bf16.msra.mxu0 %v3222
    %3335 = vmatprep.mubr.bf16.mxu0 %v2998
    %3336 = vmatmul.mubr.bf16.gmra.mxu0 %v2997
    %v3337 = vpop.f32.mrf.mxu0
    %v3338 = vadd.f32 %v3297, %v3337
    %v3339 = vpop.f32.mrf.mxu0
    %v3340 = vpop.f32.mrf.mxu0
    %v3341 = vadd.f32 %v3300, %v3340
    %v3342 = vpop.f32.mrf.mxu0
    %3343 = vdwg.mxu0
    %3344 = vst [vmem:[#allocation10] sm:$0xff] %v3338
    %3345 = vst [vmem:[#allocation10 + $0x8] sm:$0xff] %v3341
    // Predicated region
    $region38: #{_fpn_pallas.1} parent=1 // pred_check
      _
    $region39: #{_fpn_pallas.1} parent=1 // pred_check_branch
      %3347 = sbr.rel (0) target = $region41
    $region40: #{_fpn_pallas.1} parent=1 // pred_region
      %s3349 = ssub.s32 256, 256
      %3350 = vsyncadd [#allocation4], %s3349
      %s3351 = sshll.u32 [#allocation10], 4
      %s3352 = int_to_ptr.vmem [resolvable:$true] %s3351
      %3357 = dma.vmem_to_hbm [thread:$0]  %s3352, 256, %s5, [#allocation4], 128, 128, 8
    $region41: #{_fpn_pallas.1} parent=1 // pred_fallthru
      _
    // Predicated region
    $region42: #{_fpn_pallas.1} parent=1 // pred_check
      _
    $region43: #{_fpn_pallas.1} parent=1 // pred_check_branch
      %3359 = sbr.rel (0) target = $region45
    $region44: #{_fpn_pallas.1} parent=1 // pred_region
      %3360 = dma.done [#allocation4], 256
    $region45: #{_fpn_pallas.1} parent=1 // pred_fallthru
      _
    %3361 = vsyncpa [#allocation3], 1
    %3362 = vsyncpa [#allocation6], 1
    %3363 = vsyncpa [#allocation9], 1
    %3364 = vsyncpa [#allocation4], 1

</llo_original>
